<compile_context>
chip_gen: v6e
topology: v6e:2x2x1
jax: 0.10.0
libtpu: 0.0.40
codegen_flags: <defaults>
</compile_context>

<pallas_src>
import functools

import jax
import jax.numpy as jnp
import numpy as np
from jax.experimental import pallas as pl
from jax.experimental.pallas import tpu as pltpu

HIDDEN = 32     # feature width of every node type

CONV_ORDER = ("vals_cons", "obj_cons", "cons_obj", "vals_obj",
              "cons_vals", "obj_vals")
CONV_SEQUENCE = (("vals_cons", "obj_cons"),
                 ("cons_obj", "vals_obj"),
                 ("cons_vals", "obj_vals"))
# kernel argument order for the six dense adjacencies (src, dst)
ADJ_ORDER = (("vals", "cons"), ("obj", "cons"), ("cons", "obj"),
             ("vals", "obj"), ("cons", "vals"), ("obj", "vals"))


# --------------------------------------------------------------------------
# Fused kernel: 3 sequential conv groups (6 bipartite convs) in one launch.
# --------------------------------------------------------------------------
def _make_fused_kernel(sync_conv, compute_dtype):
    H = HIDDEN
    cd = compute_dtype

    def kernel(x_vals_ref, x_cons_ref, x_obj_ref,
               adj_vc_ref, adj_oc_ref, adj_co_ref, adj_vo_ref,
               adj_cv_ref, adj_ov_ref,
               w_grp_ref,      # (3, 3H, 2H)  pre-fused [root ; blockdiag(msg)]
               b_grp_ref,      # (3, 1, 2H)   lane-concatenated biases, f32
               cons_out_ref, obj_out_ref, vals_out_ref):
        f32 = jnp.float32
        x_vals = x_vals_ref[...]
        x_cons = x_cons_ref[...]
        x_obj = x_obj_ref[...]

        def conv_group(x_dst, src_a, adj_a, src_b, adj_b, g):
            """Two bipartite convs onto the same dst + 'mean' group combine.

            out_k = relu(x_dst @ Wroot_k + adj_k @ src_k @ Wmsg_k + b_k)
            is computed as one K-concatenated MXU push:
              [x_dst | adj_a@src_a | adj_b@src_b] @ [[Wroot_a | Wroot_b]
                                                     [Wmsg_a  |   0    ]
                                                     [  0     | Wmsg_b ]]
            so the MXU sees K = 3H, N = 2H instead of five K=32/N=32 matmuls.
            """
            # degree-normalized weighted aggregation; adjacency kept in f32
            agg_a = jnp.dot(adj_a, src_a.astype(f32),
                            preferred_element_type=f32)
            agg_b = jnp.dot(adj_b, src_b.astype(f32),
                            preferred_element_type=f32)
            lhs = jnp.concatenate(
                [x_dst.astype(cd), agg_a.astype(cd), agg_b.astype(cd)], axis=1)
            pre = jnp.dot(lhs, w_grp_ref[g],
                          preferred_element_type=f32) + b_grp_ref[g]
            h = jnp.maximum(pre, 0.0)          # relu on lane-dense (n_dst, 2H)
            # group 'mean' of the two convs
            # TODO(synk): a pltpu.roll(h, H, axis=1)+add would keep the combine
            # on the XLU once sub-128-lane roll lowering is verified; the two
            # lane slices are negligible at these sizes.
            return 0.5 * (h[:, :H] + h[:, H:])

        # group 1: cons <- mean(vals->cons, obj->cons)
        cons_new = conv_group(x_cons, x_vals, adj_vc_ref[...],
                              x_obj, adj_oc_ref[...], 0)
        cons_src = x_cons if sync_conv else cons_new.astype(cd)
        # group 2: obj <- mean(cons->obj, vals->obj)   (sees updated cons)
        obj_new = conv_group(x_obj, cons_src, adj_co_ref[...],
                             x_vals, adj_vo_ref[...], 1)
        obj_src = x_obj if sync_conv else obj_new.astype(cd)
        # group 3: vals <- mean(cons->vals, obj->vals) (sees updated cons, obj)
        vals_new = conv_group(x_vals, cons_src, adj_cv_ref[...],
                              obj_src, adj_ov_ref[...], 2)

        cons_out_ref[...] = cons_new.astype(cons_out_ref.dtype)
        obj_out_ref[...] = obj_new.astype(obj_out_ref.dtype)
        vals_out_ref[...] = vals_new.astype(vals_out_ref.dtype)

    return kernel


def _cost_estimate(n_vals, n_cons, n_obj, h, compute_dtype):
    # (n_dst, n_src_a, n_src_b) per group
    groups = [(n_cons, n_vals, n_obj), (n_obj, n_cons, n_vals),
              (n_vals, n_cons, n_obj)]
    flops = 0
    for n_dst, n_a, n_b in groups:
        flops += 2 * n_dst * (n_a + n_b) * h      # weighted mean aggregation
        flops += 2 * n_dst * (3 * h) * (2 * h)    # fused root + message matmul
    cd_bytes = jnp.dtype(compute_dtype).itemsize
    adj_elems = sum(nd * ns for nd, na, nb in groups for ns in (na, nb))
    n_total = n_vals + n_cons + n_obj
    bytes_accessed = (cd_bytes * n_total * h            # features in
                      + 4 * n_total * h                 # outputs (f32)
                      + 4 * adj_elems                   # f32 adjacencies
                      + cd_bytes * 3 * 3 * h * 2 * h    # fused weight slabs
                      + 4 * 3 * 2 * h)                  # biases
    return pl.CostEstimate(flops=int(flops), transcendentals=0,
                           bytes_accessed=int(bytes_accessed))


def tripartite_conv_lp_forward(x_vals, x_cons, x_obj, adj, w_grp, b_grp, *,
                               sync_conv=False, compute_dtype=jnp.float32):
    """Single fused pallas_call for the whole tripartite forward.

    adj: dict {(src, dst): dense [n_dst, n_src] mean-weighted adjacency}.
    w_grp: (3, 3H, 2H) pre-fused group weight slabs (built once in __init__).
    b_grp: (3, 1, 2H)  lane-concatenated group biases (f32).
    """
    h = HIDDEN
    cd = compute_dtype
    n_vals, n_cons, n_obj = x_vals.shape[0], x_cons.shape[0], x_obj.shape[0]

    xs = [x_vals.astype(cd), x_cons.astype(cd), x_obj.astype(cd)]
    # adjacency / degree normalization stays f32 regardless of compute_dtype
    adjs = [adj[k].astype(jnp.float32) for k in ADJ_ORDER]

    def full(shape):
        nd = len(shape)
        return pl.BlockSpec(shape, lambda i, _nd=nd: (0,) * _nd)

    in_arrays = xs + adjs + [w_grp, b_grp]
    in_specs = [full(a.shape) for a in in_arrays]
    out_shape = (jax.ShapeDtypeStruct((n_cons, h), jnp.float32),
                 jax.ShapeDtypeStruct((n_obj, h), jnp.float32),
                 jax.ShapeDtypeStruct((n_vals, h), jnp.float32))
    out_specs = [full(s.shape) for s in out_shape]

    cons_new, obj_new, vals_new = pl.pallas_call(
        _make_fused_kernel(sync_conv, cd),
        out_shape=out_shape,
        grid_spec=pl.GridSpec(grid=(1,), in_specs=in_specs,
                              out_specs=out_specs),
        compiler_params=pltpu.CompilerParams(
            dimension_semantics=("arbitrary",)),
        cost_estimate=_cost_estimate(n_vals, n_cons, n_obj, h, cd),
    )(*in_arrays)
    return {"vals": vals_new, "cons": cons_new, "obj": obj_new}


# --------------------------------------------------------------------------
# One-time parameter fusion (hoisted out of the per-call path).
# --------------------------------------------------------------------------
def _prepare_group_params(conv_params, compute_dtype):
    """Per group (convs a,b onto same dst) build the (3H, 2H) fused slab:
       [[Wroot_a | Wroot_b]; [Wmsg_a | 0]; [0 | Wmsg_b]]  and bias [b_a | b_b].
    """
    H = HIDDEN
    zeros = jnp.zeros((H, H), jnp.float32)
    w_list, b_list = [], []
    for a, b in CONV_SEQUENCE:
        pa, pb = conv_params[a], conv_params[b]
        w = jnp.concatenate([
            jnp.concatenate([pa["w_root"], pb["w_root"]], axis=1),
            jnp.concatenate([pa["w_msg"], zeros], axis=1),
            jnp.concatenate([zeros, pb["w_msg"]], axis=1)], axis=0)
        w_list.append(w)                                         # (3H, 2H)
        b_list.append(jnp.concatenate([pa["b"], pb["b"]], axis=1))  # (1, 2H)
    w_grp = jnp.stack(w_list).astype(compute_dtype)              # (3, 3H, 2H)
    b_grp = jnp.stack(b_list).astype(jnp.float32)                # (3, 1, 2H)
    return w_grp, b_grp


# --------------------------------------------------------------------------
# Plain-JAX glue: dense weighted mean adjacency from edge_index / edge_attr.
# (Runs under the same jit as the kernel; see TODO for the production CSR path.)
# --------------------------------------------------------------------------
def dense_mean_adj(edge_index, edge_attr, n_dst, n_src, norm=None):
    """Dense [n_dst, n_src] weighted adjacency, row-normalized by in-degree."""
    src, dst = edge_index[0], edge_index[1]
    w = edge_attr.reshape(-1).astype(jnp.float32)
    if norm is not None:
        w = w * norm.reshape(-1).astype(jnp.float32)
    adj = jnp.zeros((n_dst, n_src), jnp.float32).at[dst, src].add(w)
    deg = jnp.zeros((n_dst,), jnp.float32).at[dst].add(1.0)
    return adj / jnp.maximum(deg, 1.0)[:, None]


def _tripartite_forward(x_vals, x_cons, x_obj, edge_index_dict, edge_attr_dict,
                        norm_dict, w_grp, b_grp, *, sync_conv, compute_dtype):
    """Adjacency build + fused pallas_call; jitted once per model."""
    n = {"vals": x_vals.shape[0], "cons": x_cons.shape[0],
         "obj": x_obj.shape[0]}
    adj = {}
    for name in CONV_ORDER:
        src, dst = name.split("_")
        et = (src, "to", dst)
        adj[(src, dst)] = dense_mean_adj(
            edge_index_dict[et], edge_attr_dict[et], n[dst], n[src],
            norm_dict[et])
    return tripartite_conv_lp_forward(
        x_vals, x_cons, x_obj, adj, w_grp, b_grp,
        sync_conv=sync_conv, compute_dtype=compute_dtype)


class TripartiteConvLP:
    """JAX/Pallas port of the torch TripartiteConvLP forward pass."""

    def __init__(self, conv_params, sync_conv=False,
                 compute_dtype=jnp.float32):
        self.sync_conv = sync_conv
        self.compute_dtype = compute_dtype
        # Our conv has no `x_0` argument in its signature -> has_skip = False,
        # matching the torch logic that only appends x0_dict when present.
        self.has_skip = False
        self.conv_sequence = CONV_SEQUENCE
        # one-time parameter fusion + a single jit for the whole forward
        self.w_grp, self.b_grp = _prepare_group_params(conv_params,
                                                       compute_dtype)
        self._forward = jax.jit(functools.partial(
            _tripartite_forward, sync_conv=sync_conv,
            compute_dtype=compute_dtype))

    def __call__(self, x_dict, x0_dict, batch_dict, edge_index_dict,
                 edge_attr_dict, norm_dict):
        # TODO(synk): batch_dict / x0_dict are only consumed by conv variants
        # with graph-level pooling or skip connections; the conv realized here
        # needs neither (has_skip=False path), so they are accepted but unused.
        out = self._forward(x_dict["vals"], x_dict["cons"], x_dict["obj"],
                            edge_index_dict, edge_attr_dict, norm_dict,
                            self.w_grp, self.b_grp)
        if self.sync_conv:
            return out
        new_x = dict(x_dict)
        new_x.update(out)
        return new_x


# --------------------------------------------------------------------------
# Pure-JAX reference (same math, conv-by-conv) for correctness checking.
# --------------------------------------------------------------------------
def _reference_forward(x_dict, adj, params, sync_conv=False):
    hi = jax.lax.Precision.HIGHEST
    x = dict(x_dict)
    new = {}
    for group_names in CONV_SEQUENCE:
        dst = group_names[0].split("_")[1]
        hs = []
        for name in group_names:
            src, dst = name.split("_")
            p = params[name]
            msg = jnp.dot(x[src], p["w_msg"], precision=hi)
            aggv = jnp.dot(adj[(src, dst)], msg, precision=hi)
            root = jnp.dot(x[dst], p["w_root"], precision=hi)
            hs.append(jnp.maximum(root + aggv + p["b"], 0.0))
        res = 0.5 * (hs[0] + hs[1])
        if sync_conv:
            new[dst] = res
        else:
            x[dst] = res
    return new if sync_conv else x


def init_conv_params(key, hidden):
    k_msg, k_root, k_b = jax.random.split(key, 3)
    scale = 1.0 / jnp.sqrt(jnp.float32(hidden))
    return {
        "w_msg": jax.random.normal(k_msg, (hidden, hidden), jnp.float32) * scale,
        "w_root": jax.random.normal(k_root, (hidden, hidden), jnp.float32) * scale,
        "b": jax.random.normal(k_b, (1, hidden), jnp.float32) * 0.01,
    }


if __name__ == "__main__":
    key = jax.random.PRNGKey(0)
    keys = iter(jax.random.split(key, 32))

    H = HIDDEN
    num_nodes = {"vals": 64, "cons": 48, "obj": 8}
    num_edges = 128
    edge_types = [("vals", "to", "cons"), ("obj", "to", "cons"),
                  ("cons", "to", "obj"), ("vals", "to", "obj"),
                  ("cons", "to", "vals"), ("obj", "to", "vals")]

    # deterministic parameters for the six bipartite convs
    conv_params = {name: init_conv_params(next(keys), H)
                   for name in CONV_ORDER}

    # node features / skip features / batch assignment (2 graphs)
    x_dict = {t: jax.random.normal(next(keys), (num_nodes[t], H), jnp.float32)
              for t in ("vals", "cons", "obj")}
    x0_dict = {t: x_dict[t] for t in x_dict}
    batch_dict = {t: jnp.zeros((num_nodes[t],), jnp.int32)
                      .at[num_nodes[t] // 2:].set(1)
                  for t in x_dict}

    # random bipartite edges with scalar LP-coefficient edge attributes
    edge_index_dict, edge_attr_dict, norm_dict = {}, {}, {}
    for et in edge_types:
        src_t, _, dst_t = et
        k_s, k_d, k_a = jax.random.split(next(keys), 3)
        src_idx = jax.random.randint(k_s, (num_edges,), 0, num_nodes[src_t])
        dst_idx = jax.random.randint(k_d, (num_edges,), 0, num_nodes[dst_t])
        edge_index_dict[et] = jnp.stack([src_idx, dst_idx]).astype(jnp.int32)
        edge_attr_dict[et] = jax.random.normal(k_a, (num_edges,), jnp.float32)
        norm_dict[et] = None

    model = TripartiteConvLP(conv_params, sync_conv=False)
    out_dict = model(x_dict, x0_dict, batch_dict, edge_index_dict,
                     edge_attr_dict, norm_dict)
    jax.block_until_ready(out_dict)

    assert out_dict["vals"].shape == (num_nodes["vals"], H)
    assert out_dict["cons"].shape == (num_nodes["cons"], H)
    assert out_dict["obj"].shape == (num_nodes["obj"], H)

    # correctness check against a pure-JAX reference
    adj_ref = {}
    for name in CONV_ORDER:
        src, dst = name.split("_")
        et = (src, "to", dst)
        adj_ref[(src, dst)] = dense_mean_adj(
            edge_index_dict[et], edge_attr_dict[et],
            num_nodes[dst], num_nodes[src], norm_dict[et])
    ref_dict = _reference_forward(x_dict, adj_ref, conv_params,
                                  sync_conv=False)
    for t in ("vals", "cons", "obj"):
        np.testing.assert_allclose(np.asarray(out_dict[t]),
                                   np.asarray(ref_dict[t]),
                                   rtol=2e-2, atol=2e-2)

    print("KERNEL_OK")
</pallas_src>

<mosaic_0001>
module attributes {stable_mosaic.version = 11 : i64} {
  func.func private @main(%arg0: i32) attributes {dimension_semantics = [#tpu.dimension_semantics<core_parallel>], iteration_bounds = array<i64: 2>, tpu.core_type = #tpu.core_type<sc_scalar_subcore>, window_params = []} {
    return
  }
}

module attributes {stable_mosaic.version = 11 : i64} {
  func.func private @main(%arg0: i32) attributes {dimension_semantics = [#tpu.dimension_semantics<core_parallel>], iteration_bounds = array<i64: 2>, tpu.core_type = #tpu.core_type<sc_scalar_subcore>, window_params = []} {
    return
  }
}

module attributes {stable_mosaic.version = 11 : i64} {
  func.func @kernel(%arg0: i32, %arg1: memref<64x32xf32, #tpu.memory_space<vmem>>, %arg2: memref<48x32xf32, #tpu.memory_space<vmem>>, %arg3: memref<8x32xf32, #tpu.memory_space<vmem>>, %arg4: memref<48x64xf32, #tpu.memory_space<vmem>>, %arg5: memref<48x8xf32, #tpu.memory_space<vmem>>, %arg6: memref<8x48xf32, #tpu.memory_space<vmem>>, %arg7: memref<8x64xf32, #tpu.memory_space<vmem>>, %arg8: memref<64x48xf32, #tpu.memory_space<vmem>>, %arg9: memref<64x8xf32, #tpu.memory_space<vmem>>, %arg10: memref<3x96x64xf32, #tpu.memory_space<vmem>>, %arg11: memref<3x1x64xf32, #tpu.memory_space<vmem>>, %arg12: memref<48x32xf32, #tpu.memory_space<vmem>>, %arg13: memref<8x32xf32, #tpu.memory_space<vmem>>, %arg14: memref<64x32xf32, #tpu.memory_space<vmem>>) attributes {dimension_semantics = [#tpu.dimension_semantics<arbitrary>], iteration_bounds = array<i64: 1>, scalar_prefetch = 0 : i64, scratch_operands = 0 : i64, tpu.core_type = #tpu.core_type<tc>, window_params = [{pipeline_mode = #tpu.pipeline_mode<synchronous>, transform_indices = @transform_0, window_bounds = array<i64: 64, 32>}, {pipeline_mode = #tpu.pipeline_mode<synchronous>, transform_indices = @transform_1, window_bounds = array<i64: 48, 32>}, {pipeline_mode = #tpu.pipeline_mode<synchronous>, transform_indices = @transform_2, window_bounds = array<i64: 8, 32>}, {pipeline_mode = #tpu.pipeline_mode<synchronous>, transform_indices = @transform_3, window_bounds = array<i64: 48, 64>}, {pipeline_mode = #tpu.pipeline_mode<synchronous>, transform_indices = @transform_4, window_bounds = array<i64: 48, 8>}, {pipeline_mode = #tpu.pipeline_mode<synchronous>, transform_indices = @transform_5, window_bounds = array<i64: 8, 48>}, {pipeline_mode = #tpu.pipeline_mode<synchronous>, transform_indices = @transform_6, window_bounds = array<i64: 8, 64>}, {pipeline_mode = #tpu.pipeline_mode<synchronous>, transform_indices = @transform_7, window_bounds = array<i64: 64, 48>}, {pipeline_mode = #tpu.pipeline_mode<synchronous>, transform_indices = @transform_8, window_bounds = array<i64: 64, 8>}, {pipeline_mode = #tpu.pipeline_mode<synchronous>, transform_indices = @transform_9, window_bounds = array<i64: 3, 96, 64>}, {pipeline_mode = #tpu.pipeline_mode<synchronous>, transform_indices = @transform_10, window_bounds = array<i64: 3, 1, 64>}, {pipeline_mode = #tpu.pipeline_mode<synchronous>, transform_indices = @transform_11, window_bounds = array<i64: 48, 32>}, {pipeline_mode = #tpu.pipeline_mode<synchronous>, transform_indices = @transform_12, window_bounds = array<i64: 8, 32>}, {pipeline_mode = #tpu.pipeline_mode<synchronous>, transform_indices = @transform_13, window_bounds = array<i64: 64, 32>}]} {
    %c0 = arith.constant 0 : index
    %c0_0 = arith.constant 0 : index
    %0 = vector.load %arg1[%c0, %c0_0] : memref<64x32xf32, #tpu.memory_space<vmem>>, vector<64x32xf32>
    %c0_1 = arith.constant 0 : index
    %c0_2 = arith.constant 0 : index
    %1 = vector.load %arg2[%c0_1, %c0_2] : memref<48x32xf32, #tpu.memory_space<vmem>>, vector<48x32xf32>
    %c0_3 = arith.constant 0 : index
    %c0_4 = arith.constant 0 : index
    %2 = vector.load %arg3[%c0_3, %c0_4] : memref<8x32xf32, #tpu.memory_space<vmem>>, vector<8x32xf32>
    %c0_5 = arith.constant 0 : index
    %c0_6 = arith.constant 0 : index
    %3 = vector.load %arg4[%c0_5, %c0_6] : memref<48x64xf32, #tpu.memory_space<vmem>>, vector<48x64xf32>
    %c0_7 = arith.constant 0 : index
    %c0_8 = arith.constant 0 : index
    %4 = vector.load %arg5[%c0_7, %c0_8] : memref<48x8xf32, #tpu.memory_space<vmem>>, vector<48x8xf32>
    %cst = arith.constant dense<0.000000e+00> : vector<48x32xf32>
    %5 = tpu.matmul %3, %0, %cst {dimension_numbers = #tpu.dot_dimension_numbers<[1], [0], [0], [1], [0, 0, 1, 1], [], []>} : vector<48x64xf32>, vector<64x32xf32>, vector<48x32xf32> -> vector<48x32xf32>
    %cst_9 = arith.constant dense<0.000000e+00> : vector<48x32xf32>
    %6 = tpu.matmul %4, %2, %cst_9 {dimension_numbers = #tpu.dot_dimension_numbers<[1], [0], [0], [1], [0, 0, 1, 1], [], []>} : vector<48x8xf32>, vector<8x32xf32>, vector<48x32xf32> -> vector<48x32xf32>
    %7 = tpu.concatenate %1, %5, %6 in 1 : vector<48x32xf32>, vector<48x32xf32>, vector<48x32xf32> -> vector<48x96xf32>
    %c0_10 = arith.constant 0 : index
    %c0_11 = arith.constant 0 : index
    %c0_12 = arith.constant 0 : index
    %8 = vector.load %arg10[%c0_10, %c0_11, %c0_12] : memref<3x96x64xf32, #tpu.memory_space<vmem>>, vector<1x96x64xf32>
    %9 = vector.shape_cast %8 : vector<1x96x64xf32> to vector<96x64xf32>
    %cst_13 = arith.constant dense<0.000000e+00> : vector<48x64xf32>
    %10 = tpu.matmul %7, %9, %cst_13 {dimension_numbers = #tpu.dot_dimension_numbers<[1], [0], [0], [1], [0, 0, 1, 1], [], []>} : vector<48x96xf32>, vector<96x64xf32>, vector<48x64xf32> -> vector<48x64xf32>
    %c0_14 = arith.constant 0 : index
    %c0_15 = arith.constant 0 : index
    %c0_16 = arith.constant 0 : index
    %11 = vector.load %arg11[%c0_14, %c0_15, %c0_16] : memref<3x1x64xf32, #tpu.memory_space<vmem>>, vector<1x1x64xf32>
    %12 = vector.shape_cast %11 : vector<1x1x64xf32> to vector<1x64xf32>
    %13 = vector.broadcast %12 : vector<1x64xf32> to vector<48x64xf32>
    %14 = arith.addf %10, %13 : vector<48x64xf32>
    %cst_17 = arith.constant 0.000000e+00 : f32
    %15 = vector.broadcast %cst_17 : f32 to vector<48x64xf32>
    %16 = arith.maximumf %14, %15 : vector<48x64xf32>
    %17 = vector.extract_strided_slice %16 {offsets = [0, 0], sizes = [48, 32], strides = [1, 1]} : vector<48x64xf32> to vector<48x32xf32>
    %18 = vector.extract_strided_slice %16 {offsets = [0, 32], sizes = [48, 32], strides = [1, 1]} : vector<48x64xf32> to vector<48x32xf32>
    %19 = arith.addf %17, %18 : vector<48x32xf32>
    %cst_18 = arith.constant 5.000000e-01 : f32
    %20 = vector.broadcast %cst_18 : f32 to vector<48x32xf32>
    %21 = arith.mulf %20, %19 : vector<48x32xf32>
    %c0_19 = arith.constant 0 : index
    %c0_20 = arith.constant 0 : index
    %22 = vector.load %arg6[%c0_19, %c0_20] : memref<8x48xf32, #tpu.memory_space<vmem>>, vector<8x48xf32>
    %c0_21 = arith.constant 0 : index
    %c0_22 = arith.constant 0 : index
    %23 = vector.load %arg7[%c0_21, %c0_22] : memref<8x64xf32, #tpu.memory_space<vmem>>, vector<8x64xf32>
    %cst_23 = arith.constant dense<0.000000e+00> : vector<8x32xf32>
    %24 = tpu.matmul %22, %21, %cst_23 {dimension_numbers = #tpu.dot_dimension_numbers<[1], [0], [0], [1], [0, 0, 1, 1], [], []>} : vector<8x48xf32>, vector<48x32xf32>, vector<8x32xf32> -> vector<8x32xf32>
    %cst_24 = arith.constant dense<0.000000e+00> : vector<8x32xf32>
    %25 = tpu.matmul %23, %0, %cst_24 {dimension_numbers = #tpu.dot_dimension_numbers<[1], [0], [0], [1], [0, 0, 1, 1], [], []>} : vector<8x64xf32>, vector<64x32xf32>, vector<8x32xf32> -> vector<8x32xf32>
    %26 = tpu.concatenate %2, %24, %25 in 1 : vector<8x32xf32>, vector<8x32xf32>, vector<8x32xf32> -> vector<8x96xf32>
    %c1 = arith.constant 1 : index
    %c0_25 = arith.constant 0 : index
    %c0_26 = arith.constant 0 : index
    %27 = vector.load %arg10[%c1, %c0_25, %c0_26] : memref<3x96x64xf32, #tpu.memory_space<vmem>>, vector<1x96x64xf32>
    %28 = vector.shape_cast %27 : vector<1x96x64xf32> to vector<96x64xf32>
    %cst_27 = arith.constant dense<0.000000e+00> : vector<8x64xf32>
    %29 = tpu.matmul %26, %28, %cst_27 {dimension_numbers = #tpu.dot_dimension_numbers<[1], [0], [0], [1], [0, 0, 1, 1], [], []>} : vector<8x96xf32>, vector<96x64xf32>, vector<8x64xf32> -> vector<8x64xf32>
    %c1_28 = arith.constant 1 : index
    %c0_29 = arith.constant 0 : index
    %c0_30 = arith.constant 0 : index
    %30 = vector.load %arg11[%c1_28, %c0_29, %c0_30] : memref<3x1x64xf32, #tpu.memory_space<vmem>>, vector<1x1x64xf32>
    %31 = vector.shape_cast %30 : vector<1x1x64xf32> to vector<1x64xf32>
    %32 = vector.broadcast %31 : vector<1x64xf32> to vector<8x64xf32>
    %33 = arith.addf %29, %32 : vector<8x64xf32>
    %cst_31 = arith.constant 0.000000e+00 : f32
    %34 = vector.broadcast %cst_31 : f32 to vector<8x64xf32>
    %35 = arith.maximumf %33, %34 : vector<8x64xf32>
    %36 = vector.extract_strided_slice %35 {offsets = [0, 0], sizes = [8, 32], strides = [1, 1]} : vector<8x64xf32> to vector<8x32xf32>
    %37 = vector.extract_strided_slice %35 {offsets = [0, 32], sizes = [8, 32], strides = [1, 1]} : vector<8x64xf32> to vector<8x32xf32>
    %38 = arith.addf %36, %37 : vector<8x32xf32>
    %cst_32 = arith.constant 5.000000e-01 : f32
    %39 = vector.broadcast %cst_32 : f32 to vector<8x32xf32>
    %40 = arith.mulf %39, %38 : vector<8x32xf32>
    %c0_33 = arith.constant 0 : index
    %c0_34 = arith.constant 0 : index
    %41 = vector.load %arg8[%c0_33, %c0_34] : memref<64x48xf32, #tpu.memory_space<vmem>>, vector<64x48xf32>
    %c0_35 = arith.constant 0 : index
    %c0_36 = arith.constant 0 : index
    %42 = vector.load %arg9[%c0_35, %c0_36] : memref<64x8xf32, #tpu.memory_space<vmem>>, vector<64x8xf32>
    %cst_37 = arith.constant dense<0.000000e+00> : vector<64x32xf32>
    %43 = tpu.matmul %41, %21, %cst_37 {dimension_numbers = #tpu.dot_dimension_numbers<[1], [0], [0], [1], [0, 0, 1, 1], [], []>} : vector<64x48xf32>, vector<48x32xf32>, vector<64x32xf32> -> vector<64x32xf32>
    %cst_38 = arith.constant dense<0.000000e+00> : vector<64x32xf32>
    %44 = tpu.matmul %42, %40, %cst_38 {dimension_numbers = #tpu.dot_dimension_numbers<[1], [0], [0], [1], [0, 0, 1, 1], [], []>} : vector<64x8xf32>, vector<8x32xf32>, vector<64x32xf32> -> vector<64x32xf32>
    %45 = tpu.concatenate %0, %43, %44 in 1 : vector<64x32xf32>, vector<64x32xf32>, vector<64x32xf32> -> vector<64x96xf32>
    %c2 = arith.constant 2 : index
    %c0_39 = arith.constant 0 : index
    %c0_40 = arith.constant 0 : index
    %46 = vector.load %arg10[%c2, %c0_39, %c0_40] : memref<3x96x64xf32, #tpu.memory_space<vmem>>, vector<1x96x64xf32>
    %47 = vector.shape_cast %46 : vector<1x96x64xf32> to vector<96x64xf32>
    %cst_41 = arith.constant dense<0.000000e+00> : vector<64x64xf32>
    %48 = tpu.matmul %45, %47, %cst_41 {dimension_numbers = #tpu.dot_dimension_numbers<[1], [0], [0], [1], [0, 0, 1, 1], [], []>} : vector<64x96xf32>, vector<96x64xf32>, vector<64x64xf32> -> vector<64x64xf32>
    %c2_42 = arith.constant 2 : index
    %c0_43 = arith.constant 0 : index
    %c0_44 = arith.constant 0 : index
    %49 = vector.load %arg11[%c2_42, %c0_43, %c0_44] : memref<3x1x64xf32, #tpu.memory_space<vmem>>, vector<1x1x64xf32>
    %50 = vector.shape_cast %49 : vector<1x1x64xf32> to vector<1x64xf32>
    %51 = vector.broadcast %50 : vector<1x64xf32> to vector<64x64xf32>
    %52 = arith.addf %48, %51 : vector<64x64xf32>
    %cst_45 = arith.constant 0.000000e+00 : f32
    %53 = vector.broadcast %cst_45 : f32 to vector<64x64xf32>
    %54 = arith.maximumf %52, %53 : vector<64x64xf32>
    %55 = vector.extract_strided_slice %54 {offsets = [0, 0], sizes = [64, 32], strides = [1, 1]} : vector<64x64xf32> to vector<64x32xf32>
    %56 = vector.extract_strided_slice %54 {offsets = [0, 32], sizes = [64, 32], strides = [1, 1]} : vector<64x64xf32> to vector<64x32xf32>
    %57 = arith.addf %55, %56 : vector<64x32xf32>
    %cst_46 = arith.constant 5.000000e-01 : f32
    %58 = vector.broadcast %cst_46 : f32 to vector<64x32xf32>
    %59 = arith.mulf %58, %57 : vector<64x32xf32>
    %c0_47 = arith.constant 0 : index
    %c0_48 = arith.constant 0 : index
    %60 = vector.load %arg12[%c0_47, %c0_48] : memref<48x32xf32, #tpu.memory_space<vmem>>, vector<48x32xf32>
    tpu.vector_store %arg12[%c0_47, %c0_48], %21 {strides = array<i32>} : memref<48x32xf32, #tpu.memory_space<vmem>>, vector<48x32xf32>,
    %c0_49 = arith.constant 0 : index
    %c0_50 = arith.constant 0 : index
    %61 = vector.load %arg13[%c0_49, %c0_50] : memref<8x32xf32, #tpu.memory_space<vmem>>, vector<8x32xf32>
    tpu.vector_store %arg13[%c0_49, %c0_50], %40 {strides = array<i32>} : memref<8x32xf32, #tpu.memory_space<vmem>>, vector<8x32xf32>,
    %c0_51 = arith.constant 0 : index
    %c0_52 = arith.constant 0 : index
    %62 = vector.load %arg14[%c0_51, %c0_52] : memref<64x32xf32, #tpu.memory_space<vmem>>, vector<64x32xf32>
    tpu.vector_store %arg14[%c0_51, %c0_52], %59 {strides = array<i32>} : memref<64x32xf32, #tpu.memory_space<vmem>>, vector<64x32xf32>,
    return
  }
  func.func @transform_0(%arg0: i32) -> (i32, i32) {
    %c0_i32 = arith.constant 0 : i32
    %c0_i32_0 = arith.constant 0 : i32
    %c0_i32_1 = arith.constant 0 : i32
    return %c0_i32, %c0_i32_0 : i32, i32
  }
  func.func @transform_1(%arg0: i32) -> (i32, i32) {
    %c0_i32 = arith.constant 0 : i32
    %c0_i32_0 = arith.constant 0 : i32
    %c0_i32_1 = arith.constant 0 : i32
    return %c0_i32, %c0_i32_0 : i32, i32
  }
  func.func @transform_2(%arg0: i32) -> (i32, i32) {
    %c0_i32 = arith.constant 0 : i32
    %c0_i32_0 = arith.constant 0 : i32
    %c0_i32_1 = arith.constant 0 : i32
    return %c0_i32, %c0_i32_0 : i32, i32
  }
  func.func @transform_3(%arg0: i32) -> (i32, i32) {
    %c0_i32 = arith.constant 0 : i32
    %c0_i32_0 = arith.constant 0 : i32
    %c0_i32_1 = arith.constant 0 : i32
    return %c0_i32, %c0_i32_0 : i32, i32
  }
  func.func @transform_4(%arg0: i32) -> (i32, i32) {
    %c0_i32 = arith.constant 0 : i32
    %c0_i32_0 = arith.constant 0 : i32
    %c0_i32_1 = arith.constant 0 : i32
    return %c0_i32, %c0_i32_0 : i32, i32
  }
  func.func @transform_5(%arg0: i32) -> (i32, i32) {
    %c0_i32 = arith.constant 0 : i32
    %c0_i32_0 = arith.constant 0 : i32
    %c0_i32_1 = arith.constant 0 : i32
    return %c0_i32, %c0_i32_0 : i32, i32
  }
  func.func @transform_6(%arg0: i32) -> (i32, i32) {
    %c0_i32 = arith.constant 0 : i32
    %c0_i32_0 = arith.constant 0 : i32
    %c0_i32_1 = arith.constant 0 : i32
    return %c0_i32, %c0_i32_0 : i32, i32
  }
  func.func @transform_7(%arg0: i32) -> (i32, i32) {
    %c0_i32 = arith.constant 0 : i32
    %c0_i32_0 = arith.constant 0 : i32
    %c0_i32_1 = arith.constant 0 : i32
    return %c0_i32, %c0_i32_0 : i32, i32
  }
  func.func @transform_8(%arg0: i32) -> (i32, i32) {
    %c0_i32 = arith.constant 0 : i32
    %c0_i32_0 = arith.constant 0 : i32
    %c0_i32_1 = arith.constant 0 : i32
    return %c0_i32, %c0_i32_0 : i32, i32
  }
  func.func @transform_9(%arg0: i32) -> (i32, i32, i32) {
    %c0_i32 = arith.constant 0 : i32
    %c0_i32_0 = arith.constant 0 : i32
    %c0_i32_1 = arith.constant 0 : i32
    %c0_i32_2 = arith.constant 0 : i32
    return %c0_i32, %c0_i32_0, %c0_i32_1 : i32, i32, i32
  }
  func.func @transform_10(%arg0: i32) -> (i32, i32, i32) {
    %c0_i32 = arith.constant 0 : i32
    %c0_i32_0 = arith.constant 0 : i32
    %c0_i32_1 = arith.constant 0 : i32
    %c0_i32_2 = arith.constant 0 : i32
    return %c0_i32, %c0_i32_0, %c0_i32_1 : i32, i32, i32
  }
  func.func @transform_11(%arg0: i32) -> (i32, i32) {
    %c0_i32 = arith.constant 0 : i32
    %c0_i32_0 = arith.constant 0 : i32
    %c0_i32_1 = arith.constant 0 : i32
    return %c0_i32, %c0_i32_0 : i32, i32
  }
  func.func @transform_12(%arg0: i32) -> (i32, i32) {
    %c0_i32 = arith.constant 0 : i32
    %c0_i32_0 = arith.constant 0 : i32
    %c0_i32_1 = arith.constant 0 : i32
    return %c0_i32, %c0_i32_0 : i32, i32
  }
  func.func @transform_13(%arg0: i32) -> (i32, i32) {
    %c0_i32 = arith.constant 0 : i32
    %c0_i32_0 = arith.constant 0 : i32
    %c0_i32_1 = arith.constant 0 : i32
    return %c0_i32, %c0_i32_0 : i32, i32
  }
}

</mosaic_0001>

<llo_original>
// kernel: _tripartite_forward.1
$region0: #{_tripartite_forward.1}
  #allocation0 [shape = 'u32[]', space=smem, size = 0x4, offset = 0x4, fixed_abs, tag = 'smem constant byte address 0x4 - core index']
  #allocation1 [shape = 'u32[144,128]{1,0:T(1,128)}', space=vmem, size = 0x12000, scoped, tag = 'internal scratch']
  %s0 = inlined_call_operand.vmem [shape: f32[64,32], index: 0, kind: input, shape index: {}]
  %s1 = inlined_call_operand.vmem [shape: f32[48,32], index: 1, kind: input, shape index: {}]
  %s2 = inlined_call_operand.vmem [shape: f32[8,32], index: 2, kind: input, shape index: {}]
  %s3 = inlined_call_operand.vmem [shape: f32[48,64], index: 3, kind: input, shape index: {}]
  %s4 = inlined_call_operand.vmem [shape: f32[48,8], index: 4, kind: input, shape index: {}]
  %s5 = inlined_call_operand.vmem [shape: f32[8,48], index: 5, kind: input, shape index: {}]
  %s6 = inlined_call_operand.vmem [shape: f32[8,64], index: 6, kind: input, shape index: {}]
  %s7 = inlined_call_operand.vmem [shape: f32[64,48], index: 7, kind: input, shape index: {}]
  %s8 = inlined_call_operand.vmem [shape: f32[64,8], index: 8, kind: input, shape index: {}]
  %s9 = inlined_call_operand.vmem [shape: f32[3,96,64], index: 9, kind: input, shape index: {}]
  %s10 = inlined_call_operand.vmem [shape: f32[3,1,64], index: 10, kind: input, shape index: {}]
  %s11 = inlined_call_operand.vmem [shape: f32[48,32], index: 11, kind: output, shape index: {0}]
  %s12 = inlined_call_operand.hbm [shape: f32[8,32], index: 12, kind: output, shape index: {1}]
  %s13 = inlined_call_operand.vmem [shape: f32[64,32], index: 13, kind: output, shape index: {2}]
  %14 = xla_tuple %s11, %s12, %s13
  %s15 = sld [smem:[#allocation0]]
  $region70: #{_tripartite_forward.1} parent=0
    _
  %s17 = ssub.s32 1, %s15
  %s18 = scalar_select 0, %s17, %s15
  $region1: #{_tripartite_forward.1} parent=0
    #allocation2 [shape = 'u8[4096]{0}', space=vmem, size = 0x1000, scoped, tag = 'output window, operand 1, single buffered']
    #allocation3 [shape = 's32[1]{0}', space=sflag, size = 0x4, scoped, tag = 'scoped memory for _tripartite_forward.1']
    %19 = vsyncpa [#allocation3], 0
    // Predicated region
    $region2: #{_tripartite_forward.1} parent=1 // pred_check
      _
    $region3: #{_tripartite_forward.1} parent=1 // pred_check_branch
      %21 = sbr.rel (0) target = $region5
    $region4: #{_tripartite_forward.1} parent=1 // pred_region
      _
    $region5: #{_tripartite_forward.1} parent=1 // pred_fallthru
      _
    // Predicated region
    $region6: #{_tripartite_forward.1} parent=1 // pred_check
      _
    $region7: #{_tripartite_forward.1} parent=1 // pred_check_branch
      %23 = sbr.rel (0) target = $region9
    $region8: #{_tripartite_forward.1} parent=1 // pred_region
      _
    $region9: #{_tripartite_forward.1} parent=1 // pred_fallthru
      _
    // Predicated region
    $region10: #{_tripartite_forward.1} parent=1 // pred_check
      _
    $region11: #{_tripartite_forward.1} parent=1 // pred_check_branch
      %25 = sbr.rel (0) target = $region13
    $region12: #{_tripartite_forward.1} parent=1 // pred_region
      _
    $region13: #{_tripartite_forward.1} parent=1 // pred_fallthru
      _
    // Predicated region
    $region14: #{_tripartite_forward.1} parent=1 // pred_check
      _
    $region15: #{_tripartite_forward.1} parent=1 // pred_check_branch
      %27 = sbr.rel (0) target = $region17
    $region16: #{_tripartite_forward.1} parent=1 // pred_region
      _
    $region17: #{_tripartite_forward.1} parent=1 // pred_fallthru
      _
    // Predicated region
    $region18: #{_tripartite_forward.1} parent=1 // pred_check
      _
    $region19: #{_tripartite_forward.1} parent=1 // pred_check_branch
      %29 = sbr.rel (0) target = $region21
    $region20: #{_tripartite_forward.1} parent=1 // pred_region
      _
    $region21: #{_tripartite_forward.1} parent=1 // pred_fallthru
      _
    // Predicated region
    $region22: #{_tripartite_forward.1} parent=1 // pred_check
      _
    $region23: #{_tripartite_forward.1} parent=1 // pred_check_branch
      %31 = sbr.rel (0) target = $region25
    $region24: #{_tripartite_forward.1} parent=1 // pred_region
      _
    $region25: #{_tripartite_forward.1} parent=1 // pred_fallthru
      _
    // Predicated region
    $region26: #{_tripartite_forward.1} parent=1 // pred_check
      _
    $region27: #{_tripartite_forward.1} parent=1 // pred_check_branch
      %33 = sbr.rel (0) target = $region29
    $region28: #{_tripartite_forward.1} parent=1 // pred_region
      _
    $region29: #{_tripartite_forward.1} parent=1 // pred_fallthru
      _
    // Predicated region
    $region30: #{_tripartite_forward.1} parent=1 // pred_check
      _
    $region31: #{_tripartite_forward.1} parent=1 // pred_check_branch
      %35 = sbr.rel (0) target = $region33
    $region32: #{_tripartite_forward.1} parent=1 // pred_region
      _
    $region33: #{_tripartite_forward.1} parent=1 // pred_fallthru
      _
    // Predicated region
    $region34: #{_tripartite_forward.1} parent=1 // pred_check
      _
    $region35: #{_tripartite_forward.1} parent=1 // pred_check_branch
      %37 = sbr.rel (0) target = $region37
    $region36: #{_tripartite_forward.1} parent=1 // pred_region
      _
    $region37: #{_tripartite_forward.1} parent=1 // pred_fallthru
      _
    // Predicated region
    $region38: #{_tripartite_forward.1} parent=1 // pred_check
      _
    $region39: #{_tripartite_forward.1} parent=1 // pred_check_branch
      %39 = sbr.rel (0) target = $region41
    $region40: #{_tripartite_forward.1} parent=1 // pred_region
      _
    $region41: #{_tripartite_forward.1} parent=1 // pred_fallthru
      _
    // Predicated region
    $region42: #{_tripartite_forward.1} parent=1 // pred_check
      _
    $region43: #{_tripartite_forward.1} parent=1 // pred_check_branch
      %41 = sbr.rel (0) target = $region45
    $region44: #{_tripartite_forward.1} parent=1 // pred_region
      _
    $region45: #{_tripartite_forward.1} parent=1 // pred_fallthru
      _
    %v42 = vld [vmem:[%s0] sm:$0xff]
    %v43 = vld [vmem:[%s0 + $0x8] sm:$0xff]
    %v44 = vld [vmem:[%s0 + $0x10] sm:$0xff]
    %v45 = vld [vmem:[%s0 + $0x18] sm:$0xff]
    %v46 = vld [vmem:[%s0 + $0x20] sm:$0xff]
    %v47 = vld [vmem:[%s0 + $0x28] sm:$0xff]
    %v48 = vld [vmem:[%s0 + $0x30] sm:$0xff]
    %v49 = vld [vmem:[%s0 + $0x38] sm:$0xff]
    %v50 = vld [vmem:[%s1] sm:$0xff]
    %v51 = vld [vmem:[%s1 + $0x8] sm:$0xff]
    %v52 = vld [vmem:[%s1 + $0x10] sm:$0xff]
    %v53 = vld [vmem:[%s1 + $0x18] sm:$0xff]
    %v54 = vld [vmem:[%s1 + $0x20] sm:$0xff]
    %v55 = vld [vmem:[%s1 + $0x28] sm:$0xff]
    %v56 = vld [vmem:[%s2] sm:$0xff]
    %v57 = vld [vmem:[%s3] sm:$0xff]
    %v58 = vld [vmem:[%s3 + $0x8] sm:$0xff]
    %v59 = vld [vmem:[%s3 + $0x10] sm:$0xff]
    %v60 = vld [vmem:[%s3 + $0x18] sm:$0xff]
    %v61 = vld [vmem:[%s3 + $0x20] sm:$0xff]
    %v62 = vld [vmem:[%s3 + $0x28] sm:$0xff]
    %v63 = vld [vmem:[%s4] sm:$0xff]
    %v64 = vld [vmem:[%s4 + $0x8] sm:$0xff]
    %v65 = vld [vmem:[%s4 + $0x10] sm:$0xff]
    %v66 = vld [vmem:[%s4 + $0x18] sm:$0xff]
    %v67 = vld [vmem:[%s4 + $0x20] sm:$0xff]
    %v68 = vld [vmem:[%s4 + $0x28] sm:$0xff]
    %vm69 = vcmask 523264
    %v71 = vsel %vm69, %v57, 0
    %v74 = vsel %vm69, %v58, 0
    %v77 = vsel %vm69, %v59, 0
    %v80 = vsel %vm69, %v60, 0
    %v83 = vsel %vm69, %v61, 0
    %v86 = vsel %vm69, %v62, 0
    %88 = vmatprep.subr.mxu0 0.0
    %89 = vmatpush1.msra.mxu0 0.0
    %90 = vmatprep.subr.mxu0 0.0
    %91 = vmatpush1.msra.mxu0 0.0
    %92 = vmatprep.subr.mxu0 0.0
    %93 = vmatpush1.msra.mxu0 0.0
    %94 = vmatprep.subr.mxu0 0.0
    %95 = vmatpush1.msra.mxu0 0.0
    %96 = vmatprep.subr.mxu0 0.0
    %97 = vmatpush1.msra.mxu0 0.0
    %98 = vmatprep.subr.mxu0 0.0
    %99 = vmatpush1.msra.mxu0 0.0
    %100 = vmatprep.subr.mxu0 0.0
    %101 = vmatpush1.msra.mxu0 0.0
    %102 = vmatprep.subr.mxu0 0.0
    %103 = vmatpush1.msra.mxu0 0.0
    %104 = vmatprep.subr.mxu0 0.0
    %105 = vmatpush1.msra.mxu0 %v49
    %106 = vmatprep.subr.mxu0 0.0
    %107 = vmatpush1.msra.mxu0 %v48
    %108 = vmatprep.subr.mxu0 0.0
    %109 = vmatpush1.msra.mxu0 %v47
    %110 = vmatprep.subr.mxu0 0.0
    %111 = vmatpush1.msra.mxu0 %v46
    %112 = vmatprep.subr.mxu0 0.0
    %113 = vmatpush1.msra.mxu0 %v45
    %114 = vmatprep.subr.mxu0 0.0
    %115 = vmatpush1.msra.mxu0 %v44
    %116 = vmatprep.subr.mxu0 0.0
    %117 = vmatpush1.msra.mxu0 %v43
    %118 = vmatprep.subr.mxu0 0.0
    %119 = vmatpush1.msra.mxu0 %v42
    %120 = vmatprep.subr.mxu0 0.0
    %121 = vmatpush2.msra.mxu0 0.0
    %122 = vmatprep.subr.mxu0 0.0
    %123 = vmatpush2.msra.mxu0 0.0
    %124 = vmatprep.subr.mxu0 0.0
    %125 = vmatpush2.msra.mxu0 0.0
    %126 = vmatprep.subr.mxu0 0.0
    %127 = vmatpush2.msra.mxu0 0.0
    %128 = vmatprep.subr.mxu0 0.0
    %129 = vmatpush2.msra.mxu0 0.0
    %130 = vmatprep.subr.mxu0 0.0
    %131 = vmatpush2.msra.mxu0 0.0
    %132 = vmatprep.subr.mxu0 0.0
    %133 = vmatpush2.msra.mxu0 0.0
    %134 = vmatprep.subr.mxu0 0.0
    %135 = vmatpush2.msra.mxu0 0.0
    %136 = vmatprep.subr.mxu0 0.0
    %137 = vmatpush2.msra.mxu0 0.0
    %138 = vmatprep.subr.mxu0 0.0
    %139 = vmatpush2.msra.mxu0 0.0
    %140 = vmatprep.subr.mxu0 0.0
    %141 = vmatpush2.msra.mxu0 0.0
    %142 = vmatprep.subr.mxu0 0.0
    %143 = vmatpush2.msra.mxu0 0.0
    %144 = vmatprep.subr.mxu0 0.0
    %145 = vmatpush2.msra.mxu0 0.0
    %146 = vmatprep.subr.mxu0 0.0
    %147 = vmatpush2.msra.mxu0 0.0
    %148 = vmatprep.subr.mxu0 0.0
    %149 = vmatpush2.msra.mxu0 0.0
    %150 = vmatprep.subr.mxu0 0.0
    %151 = vmatpush2.msra.mxu0 0.0
    %152 = vmatprep.mubr.f32.mxu0 0.0
    %153 = vmatmul.mubr.f32.gmra.mxu0 %v71
    %v154 = vpop.f32.mrf.mxu0
    %v155 = vadd.f32 0.0, %v154
    %v156 = vpop.f32.mrf.mxu0
    %157 = vmatprep.mubr.f32.mxu0 0.0
    %158 = vmatmul.mubr.f32.gmra.mxu0 %v74
    %v159 = vpop.f32.mrf.mxu0
    %v160 = vadd.f32 0.0, %v159
    %v161 = vpop.f32.mrf.mxu0
    %162 = vmatprep.mubr.f32.mxu0 0.0
    %163 = vmatmul.mubr.f32.gmra.mxu0 %v77
    %v164 = vpop.f32.mrf.mxu0
    %v165 = vadd.f32 0.0, %v164
    %v166 = vpop.f32.mrf.mxu0
    %167 = vmatprep.mubr.f32.mxu0 0.0
    %168 = vmatmul.mubr.f32.gmra.mxu0 %v80
    %v169 = vpop.f32.mrf.mxu0
    %v170 = vadd.f32 0.0, %v169
    %v171 = vpop.f32.mrf.mxu0
    %172 = vmatprep.mubr.f32.mxu0 0.0
    %173 = vmatmul.mubr.f32.gmra.mxu0 %v83
    %v174 = vpop.f32.mrf.mxu0
    %v175 = vadd.f32 0.0, %v174
    %v176 = vpop.f32.mrf.mxu0
    %177 = vmatprep.mubr.f32.mxu0 0.0
    %178 = vmatmul.mubr.f32.gmra.mxu0 %v86
    %v179 = vpop.f32.mrf.mxu0
    %v180 = vadd.f32 0.0, %v179
    %v181 = vpop.f32.mrf.mxu0
    %182 = vdwg.mxu0
    %vm183 = vcmask 64512
    %v185 = vsel %vm183, %v63, 0
    %v188 = vsel %vm183, %v64, 0
    %v191 = vsel %vm183, %v65, 0
    %v194 = vsel %vm183, %v66, 0
    %v197 = vsel %vm183, %v67, 0
    %v200 = vsel %vm183, %v68, 0
    %202 = vmatprep.subr.mxu0 0.0
    %203 = vmatpush1.msra.mxu0 0.0
    %204 = vmatprep.subr.mxu0 0.0
    %205 = vmatpush1.msra.mxu0 0.0
    %206 = vmatprep.subr.mxu0 0.0
    %207 = vmatpush1.msra.mxu0 0.0
    %208 = vmatprep.subr.mxu0 0.0
    %209 = vmatpush1.msra.mxu0 0.0
    %210 = vmatprep.subr.mxu0 0.0
    %211 = vmatpush1.msra.mxu0 0.0
    %212 = vmatprep.subr.mxu0 0.0
    %213 = vmatpush1.msra.mxu0 0.0
    %214 = vmatprep.subr.mxu0 0.0
    %215 = vmatpush1.msra.mxu0 0.0
    %216 = vmatprep.subr.mxu0 0.0
    %217 = vmatpush1.msra.mxu0 0.0
    %218 = vmatprep.subr.mxu0 0.0
    %219 = vmatpush1.msra.mxu0 0.0
    %220 = vmatprep.subr.mxu0 0.0
    %221 = vmatpush1.msra.mxu0 0.0
    %222 = vmatprep.subr.mxu0 0.0
    %223 = vmatpush1.msra.mxu0 0.0
    %224 = vmatprep.subr.mxu0 0.0
    %225 = vmatpush1.msra.mxu0 0.0
    %226 = vmatprep.subr.mxu0 0.0
    %227 = vmatpush1.msra.mxu0 0.0
    %228 = vmatprep.subr.mxu0 0.0
    %229 = vmatpush1.msra.mxu0 0.0
    %230 = vmatprep.subr.mxu0 0.0
    %231 = vmatpush1.msra.mxu0 0.0
    %232 = vmatprep.subr.mxu0 0.0
    %233 = vmatpush1.msra.mxu0 %v56
    %234 = vmatprep.subr.mxu0 0.0
    %235 = vmatpush2.msra.mxu0 0.0
    %236 = vmatprep.subr.mxu0 0.0
    %237 = vmatpush2.msra.mxu0 0.0
    %238 = vmatprep.subr.mxu0 0.0
    %239 = vmatpush2.msra.mxu0 0.0
    %240 = vmatprep.subr.mxu0 0.0
    %241 = vmatpush2.msra.mxu0 0.0
    %242 = vmatprep.subr.mxu0 0.0
    %243 = vmatpush2.msra.mxu0 0.0
    %244 = vmatprep.subr.mxu0 0.0
    %245 = vmatpush2.msra.mxu0 0.0
    %246 = vmatprep.subr.mxu0 0.0
    %247 = vmatpush2.msra.mxu0 0.0
    %248 = vmatprep.subr.mxu0 0.0
    %249 = vmatpush2.msra.mxu0 0.0
    %250 = vmatprep.subr.mxu0 0.0
    %251 = vmatpush2.msra.mxu0 0.0
    %252 = vmatprep.subr.mxu0 0.0
    %253 = vmatpush2.msra.mxu0 0.0
    %254 = vmatprep.subr.mxu0 0.0
    %255 = vmatpush2.msra.mxu0 0.0
    %256 = vmatprep.subr.mxu0 0.0
    %257 = vmatpush2.msra.mxu0 0.0
    %258 = vmatprep.subr.mxu0 0.0
    %259 = vmatpush2.msra.mxu0 0.0
    %260 = vmatprep.subr.mxu0 0.0
    %261 = vmatpush2.msra.mxu0 0.0
    %262 = vmatprep.subr.mxu0 0.0
    %263 = vmatpush2.msra.mxu0 0.0
    %264 = vmatprep.subr.mxu0 0.0
    %265 = vmatpush2.msra.mxu0 0.0
    %266 = vmatprep.mubr.f32.mxu0 0.0
    %267 = vmatmul.mubr.f32.gmra.mxu0 %v185
    %v268 = vpop.f32.mrf.mxu0
    %v269 = vadd.f32 0.0, %v268
    %v270 = vpop.f32.mrf.mxu0
    %271 = vmatprep.mubr.f32.mxu0 0.0
    %272 = vmatmul.mubr.f32.gmra.mxu0 %v188
    %v273 = vpop.f32.mrf.mxu0
    %v274 = vadd.f32 0.0, %v273
    %v275 = vpop.f32.mrf.mxu0
    %276 = vmatprep.mubr.f32.mxu0 0.0
    %277 = vmatmul.mubr.f32.gmra.mxu0 %v191
    %v278 = vpop.f32.mrf.mxu0
    %v279 = vadd.f32 0.0, %v278
    %v280 = vpop.f32.mrf.mxu0
    %281 = vmatprep.mubr.f32.mxu0 0.0
    %282 = vmatmul.mubr.f32.gmra.mxu0 %v194
    %v283 = vpop.f32.mrf.mxu0
    %v284 = vadd.f32 0.0, %v283
    %v285 = vpop.f32.mrf.mxu0
    %286 = vmatprep.mubr.f32.mxu0 0.0
    %287 = vmatmul.mubr.f32.gmra.mxu0 %v197
    %v288 = vpop.f32.mrf.mxu0
    %v289 = vadd.f32 0.0, %v288
    %v290 = vpop.f32.mrf.mxu0
    %291 = vmatprep.mubr.f32.mxu0 0.0
    %292 = vmatmul.mubr.f32.gmra.mxu0 %v200
    %v293 = vpop.f32.mrf.mxu0
    %v294 = vadd.f32 0.0, %v293
    %v295 = vpop.f32.mrf.mxu0
    %296 = vdwg.mxu0
    %303 = vrot.lane.b32.xlu0 %v155, 32
    %v304 = vpop.permute.xlu0 %303
    %305 = vrot.lane.b32.xlu0 %v160, 32
    %v306 = vpop.permute.xlu0 %305
    %307 = vrot.lane.b32.xlu0 %v165, 32
    %v308 = vpop.permute.xlu0 %307
    %309 = vrot.lane.b32.xlu0 %v170, 32
    %v310 = vpop.permute.xlu0 %309
    %311 = vrot.lane.b32.xlu0 %v175, 32
    %v312 = vpop.permute.xlu0 %311
    %313 = vrot.lane.b32.xlu0 %v180, 32
    %v314 = vpop.permute.xlu0 %313
    %327 = vrot.lane.b32.xlu0 %v269, 64
    %v328 = vpop.permute.xlu0 %327
    %329 = vrot.lane.b32.xlu0 %v274, 64
    %v330 = vpop.permute.xlu0 %329
    %331 = vrot.lane.b32.xlu0 %v279, 64
    %v332 = vpop.permute.xlu0 %331
    %333 = vrot.lane.b32.xlu0 %v284, 64
    %v334 = vpop.permute.xlu0 %333
    %335 = vrot.lane.b32.xlu0 %v289, 64
    %v336 = vpop.permute.xlu0 %335
    %337 = vrot.lane.b32.xlu0 %v294, 64
    %v338 = vpop.permute.xlu0 %337
    %vm345 = vcmask 261120
    %v346 = vsel %vm345, %v50, %v304
    %v347 = vsel %vm345, %v51, %v306
    %v348 = vsel %vm345, %v52, %v308
    %v349 = vsel %vm345, %v53, %v310
    %v350 = vsel %vm345, %v54, %v312
    %v351 = vsel %vm345, %v55, %v314
    %v352 = vsel %vm69, %v346, %v328
    %v353 = vsel %vm69, %v347, %v330
    %v354 = vsel %vm69, %v348, %v332
    %v355 = vsel %vm69, %v349, %v334
    %v356 = vsel %vm69, %v350, %v336
    %v357 = vsel %vm69, %v351, %v338
    %v358 = vld [vmem:[%s9] sm:$0xff]
    %v359 = vld [vmem:[%s9 + $0x8] sm:$0xff]
    %v360 = vld [vmem:[%s9 + $0x10] sm:$0xff]
    %v361 = vld [vmem:[%s9 + $0x18] sm:$0xff]
    %v362 = vld [vmem:[%s9 + $0x20] sm:$0xff]
    %v363 = vld [vmem:[%s9 + $0x28] sm:$0xff]
    %v364 = vld [vmem:[%s9 + $0x30] sm:$0xff]
    %v365 = vld [vmem:[%s9 + $0x38] sm:$0xff]
    %v366 = vld [vmem:[%s9 + $0x40] sm:$0xff]
    %v367 = vld [vmem:[%s9 + $0x48] sm:$0xff]
    %v368 = vld [vmem:[%s9 + $0x50] sm:$0xff]
    %v369 = vld [vmem:[%s9 + $0x58] sm:$0xff]
    %v370 = vld [vmem:[%s10] sm:$0x1]
    %v372 = vlaneseq
    %v373 = vshrl.u32 %v372, 7
    %v374 = vsub.s32 0, %v373
    %v375 = vrot.slane %v370, %v374
    %vm377 = vcmask 785408
    %v379 = vsel %vm377, %v352, 0
    %v382 = vsel %vm377, %v353, 0
    %v385 = vsel %vm377, %v354, 0
    %v388 = vsel %vm377, %v355, 0
    %v391 = vsel %vm377, %v356, 0
    %v394 = vsel %vm377, %v357, 0
    %396 = vmatprep.subr.mxu0 0.0
    %397 = vmatpush1.msra.mxu0 0.0
    %398 = vmatprep.subr.mxu0 0.0
    %399 = vmatpush1.msra.mxu0 0.0
    %400 = vmatprep.subr.mxu0 0.0
    %401 = vmatpush1.msra.mxu0 0.0
    %402 = vmatprep.subr.mxu0 0.0
    %403 = vmatpush1.msra.mxu0 0.0
    %404 = vmatprep.subr.mxu0 0.0
    %405 = vmatpush1.msra.mxu0 %v369
    %406 = vmatprep.subr.mxu0 0.0
    %407 = vmatpush1.msra.mxu0 %v368
    %408 = vmatprep.subr.mxu0 0.0
    %409 = vmatpush1.msra.mxu0 %v367
    %410 = vmatprep.subr.mxu0 0.0
    %411 = vmatpush1.msra.mxu0 %v366
    %412 = vmatprep.subr.mxu0 0.0
    %413 = vmatpush1.msra.mxu0 %v365
    %414 = vmatprep.subr.mxu0 0.0
    %415 = vmatpush1.msra.mxu0 %v364
    %416 = vmatprep.subr.mxu0 0.0
    %417 = vmatpush1.msra.mxu0 %v363
    %418 = vmatprep.subr.mxu0 0.0
    %419 = vmatpush1.msra.mxu0 %v362
    %420 = vmatprep.subr.mxu0 0.0
    %421 = vmatpush1.msra.mxu0 %v361
    %422 = vmatprep.subr.mxu0 0.0
    %423 = vmatpush1.msra.mxu0 %v360
    %424 = vmatprep.subr.mxu0 0.0
    %425 = vmatpush1.msra.mxu0 %v359
    %426 = vmatprep.subr.mxu0 0.0
    %427 = vmatpush1.msra.mxu0 %v358
    %428 = vmatprep.subr.mxu0 0.0
    %429 = vmatpush2.msra.mxu0 0.0
    %430 = vmatprep.subr.mxu0 0.0
    %431 = vmatpush2.msra.mxu0 0.0
    %432 = vmatprep.subr.mxu0 0.0
    %433 = vmatpush2.msra.mxu0 0.0
    %434 = vmatprep.subr.mxu0 0.0
    %435 = vmatpush2.msra.mxu0 0.0
    %436 = vmatprep.subr.mxu0 0.0
    %437 = vmatpush2.msra.mxu0 0.0
    %438 = vmatprep.subr.mxu0 0.0
    %439 = vmatpush2.msra.mxu0 0.0
    %440 = vmatprep.subr.mxu0 0.0
    %441 = vmatpush2.msra.mxu0 0.0
    %442 = vmatprep.subr.mxu0 0.0
    %443 = vmatpush2.msra.mxu0 0.0
    %444 = vmatprep.subr.mxu0 0.0
    %445 = vmatpush2.msra.mxu0 0.0
    %446 = vmatprep.subr.mxu0 0.0
    %447 = vmatpush2.msra.mxu0 0.0
    %448 = vmatprep.subr.mxu0 0.0
    %449 = vmatpush2.msra.mxu0 0.0
    %450 = vmatprep.subr.mxu0 0.0
    %451 = vmatpush2.msra.mxu0 0.0
    %452 = vmatprep.subr.mxu0 0.0
    %453 = vmatpush2.msra.mxu0 0.0
    %454 = vmatprep.subr.mxu0 0.0
    %455 = vmatpush2.msra.mxu0 0.0
    %456 = vmatprep.subr.mxu0 0.0
    %457 = vmatpush2.msra.mxu0 0.0
    %458 = vmatprep.subr.mxu0 0.0
    %459 = vmatpush2.msra.mxu0 0.0
    %460 = vmatprep.mubr.f32.mxu0 0.0
    %461 = vmatmul.mubr.f32.gmra.mxu0 %v379
    %v462 = vpop.f32.mrf.mxu0
    %v463 = vadd.f32 %v375, %v462
    %v464 = vpop.f32.mrf.mxu0
    %465 = vmatprep.mubr.f32.mxu0 0.0
    %466 = vmatmul.mubr.f32.gmra.mxu0 %v382
    %v467 = vpop.f32.mrf.mxu0
    %v468 = vadd.f32 %v375, %v467
    %v469 = vpop.f32.mrf.mxu0
    %470 = vmatprep.mubr.f32.mxu0 0.0
    %471 = vmatmul.mubr.f32.gmra.mxu0 %v385
    %v472 = vpop.f32.mrf.mxu0
    %v473 = vadd.f32 %v375, %v472
    %v474 = vpop.f32.mrf.mxu0
    %475 = vmatprep.mubr.f32.mxu0 0.0
    %476 = vmatmul.mubr.f32.gmra.mxu0 %v388
    %v477 = vpop.f32.mrf.mxu0
    %v478 = vadd.f32 %v375, %v477
    %v479 = vpop.f32.mrf.mxu0
    %480 = vmatprep.mubr.f32.mxu0 0.0
    %481 = vmatmul.mubr.f32.gmra.mxu0 %v391
    %v482 = vpop.f32.mrf.mxu0
    %v483 = vadd.f32 %v375, %v482
    %v484 = vpop.f32.mrf.mxu0
    %485 = vmatprep.mubr.f32.mxu0 0.0
    %486 = vmatmul.mubr.f32.gmra.mxu0 %v394
    %v487 = vpop.f32.mrf.mxu0
    %v488 = vadd.f32 %v375, %v487
    %v489 = vpop.f32.mrf.mxu0
    %490 = vdwg.mxu0
    %v491 = vmax.f32 %v463, 0.0
    %v492 = vmax.f32 %v468, 0.0
    %v493 = vmax.f32 %v473, 0.0
    %v494 = vmax.f32 %v478, 0.0
    %v495 = vmax.f32 %v483, 0.0
    %v496 = vmax.f32 %v488, 0.0
    %503 = vrot.lane.b32.xlu0 %v491, 96
    %v504 = vpop.permute.xlu0 %503
    %505 = vrot.lane.b32.xlu0 %v492, 96
    %v506 = vpop.permute.xlu0 %505
    %507 = vrot.lane.b32.xlu0 %v493, 96
    %v508 = vpop.permute.xlu0 %507
    %509 = vrot.lane.b32.xlu0 %v494, 96
    %v510 = vpop.permute.xlu0 %509
    %511 = vrot.lane.b32.xlu0 %v495, 96
    %v512 = vpop.permute.xlu0 %511
    %513 = vrot.lane.b32.xlu0 %v496, 96
    %v514 = vpop.permute.xlu0 %513
    %v521 = vadd.f32 %v491, %v504
    %v522 = vadd.f32 %v492, %v506
    %v523 = vadd.f32 %v493, %v508
    %v524 = vadd.f32 %v494, %v510
    %v525 = vadd.f32 %v495, %v512
    %v526 = vadd.f32 %v496, %v514
    %v527 = vmul.f32 %v521, 0.5
    %v528 = vmul.f32 %v522, 0.5
    %v529 = vmul.f32 %v523, 0.5
    %v530 = vmul.f32 %v524, 0.5
    %v531 = vmul.f32 %v525, 0.5
    %v532 = vmul.f32 %v526, 0.5
    %v533 = vld [vmem:[%s5] sm:$0xff]
    %v534 = vld [vmem:[%s6] sm:$0xff]
    %vm535 = vcmask 392192
    %v537 = vsel %vm535, %v533, 0
    %539 = vmatprep.subr.mxu0 0.0
    %540 = vmatpush1.msra.mxu0 0.0
    %541 = vmatprep.subr.mxu0 0.0
    %542 = vmatpush1.msra.mxu0 0.0
    %543 = vmatprep.subr.mxu0 0.0
    %544 = vmatpush1.msra.mxu0 0.0
    %545 = vmatprep.subr.mxu0 0.0
    %546 = vmatpush1.msra.mxu0 0.0
    %547 = vmatprep.subr.mxu0 0.0
    %548 = vmatpush1.msra.mxu0 0.0
    %549 = vmatprep.subr.mxu0 0.0
    %550 = vmatpush1.msra.mxu0 0.0
    %551 = vmatprep.subr.mxu0 0.0
    %552 = vmatpush1.msra.mxu0 0.0
    %553 = vmatprep.subr.mxu0 0.0
    %554 = vmatpush1.msra.mxu0 0.0
    %555 = vmatprep.subr.mxu0 0.0
    %556 = vmatpush1.msra.mxu0 0.0
    %557 = vmatprep.subr.mxu0 0.0
    %558 = vmatpush1.msra.mxu0 0.0
    %559 = vmatprep.subr.mxu0 0.0
    %560 = vmatpush1.msra.mxu0 %v532
    %561 = vmatprep.subr.mxu0 0.0
    %562 = vmatpush1.msra.mxu0 %v531
    %563 = vmatprep.subr.mxu0 0.0
    %564 = vmatpush1.msra.mxu0 %v530
    %565 = vmatprep.subr.mxu0 0.0
    %566 = vmatpush1.msra.mxu0 %v529
    %567 = vmatprep.subr.mxu0 0.0
    %568 = vmatpush1.msra.mxu0 %v528
    %569 = vmatprep.subr.mxu0 0.0
    %570 = vmatpush1.msra.mxu0 %v527
    %571 = vmatprep.subr.mxu0 0.0
    %572 = vmatpush2.msra.mxu0 0.0
    %573 = vmatprep.subr.mxu0 0.0
    %574 = vmatpush2.msra.mxu0 0.0
    %575 = vmatprep.subr.mxu0 0.0
    %576 = vmatpush2.msra.mxu0 0.0
    %577 = vmatprep.subr.mxu0 0.0
    %578 = vmatpush2.msra.mxu0 0.0
    %579 = vmatprep.subr.mxu0 0.0
    %580 = vmatpush2.msra.mxu0 0.0
    %581 = vmatprep.subr.mxu0 0.0
    %582 = vmatpush2.msra.mxu0 0.0
    %583 = vmatprep.subr.mxu0 0.0
    %584 = vmatpush2.msra.mxu0 0.0
    %585 = vmatprep.subr.mxu0 0.0
    %586 = vmatpush2.msra.mxu0 0.0
    %587 = vmatprep.subr.mxu0 0.0
    %588 = vmatpush2.msra.mxu0 0.0
    %589 = vmatprep.subr.mxu0 0.0
    %590 = vmatpush2.msra.mxu0 0.0
    %591 = vmatprep.subr.mxu0 0.0
    %592 = vmatpush2.msra.mxu0 0.0
    %593 = vmatprep.subr.mxu0 0.0
    %594 = vmatpush2.msra.mxu0 0.0
    %595 = vmatprep.subr.mxu0 0.0
    %596 = vmatpush2.msra.mxu0 0.0
    %597 = vmatprep.subr.mxu0 0.0
    %598 = vmatpush2.msra.mxu0 0.0
    %599 = vmatprep.subr.mxu0 0.0
    %600 = vmatpush2.msra.mxu0 0.0
    %601 = vmatprep.subr.mxu0 0.0
    %602 = vmatpush2.msra.mxu0 0.0
    %603 = vmatprep.mubr.f32.mxu0 0.0
    %604 = vmatmul.mubr.f32.gmra.mxu0 %v537
    %v605 = vpop.f32.mrf.mxu0
    %v606 = vadd.f32 0.0, %v605
    %v607 = vpop.f32.mrf.mxu0
    %608 = vdwg.mxu0
    %v610 = vsel %vm69, %v534, 0
    %612 = vmatprep.subr.mxu0 0.0
    %613 = vmatpush1.msra.mxu0 0.0
    %614 = vmatprep.subr.mxu0 0.0
    %615 = vmatpush1.msra.mxu0 0.0
    %616 = vmatprep.subr.mxu0 0.0
    %617 = vmatpush1.msra.mxu0 0.0
    %618 = vmatprep.subr.mxu0 0.0
    %619 = vmatpush1.msra.mxu0 0.0
    %620 = vmatprep.subr.mxu0 0.0
    %621 = vmatpush1.msra.mxu0 0.0
    %622 = vmatprep.subr.mxu0 0.0
    %623 = vmatpush1.msra.mxu0 0.0
    %624 = vmatprep.subr.mxu0 0.0
    %625 = vmatpush1.msra.mxu0 0.0
    %626 = vmatprep.subr.mxu0 0.0
    %627 = vmatpush1.msra.mxu0 0.0
    %628 = vmatprep.subr.mxu0 0.0
    %629 = vmatpush1.msra.mxu0 %v49
    %630 = vmatprep.subr.mxu0 0.0
    %631 = vmatpush1.msra.mxu0 %v48
    %632 = vmatprep.subr.mxu0 0.0
    %633 = vmatpush1.msra.mxu0 %v47
    %634 = vmatprep.subr.mxu0 0.0
    %635 = vmatpush1.msra.mxu0 %v46
    %636 = vmatprep.subr.mxu0 0.0
    %637 = vmatpush1.msra.mxu0 %v45
    %638 = vmatprep.subr.mxu0 0.0
    %639 = vmatpush1.msra.mxu0 %v44
    %640 = vmatprep.subr.mxu0 0.0
    %641 = vmatpush1.msra.mxu0 %v43
    %642 = vmatprep.subr.mxu0 0.0
    %643 = vmatpush1.msra.mxu0 %v42
    %644 = vmatprep.subr.mxu0 0.0
    %645 = vmatpush2.msra.mxu0 0.0
    %646 = vmatprep.subr.mxu0 0.0
    %647 = vmatpush2.msra.mxu0 0.0
    %648 = vmatprep.subr.mxu0 0.0
    %649 = vmatpush2.msra.mxu0 0.0
    %650 = vmatprep.subr.mxu0 0.0
    %651 = vmatpush2.msra.mxu0 0.0
    %652 = vmatprep.subr.mxu0 0.0
    %653 = vmatpush2.msra.mxu0 0.0
    %654 = vmatprep.subr.mxu0 0.0
    %655 = vmatpush2.msra.mxu0 0.0
    %656 = vmatprep.subr.mxu0 0.0
    %657 = vmatpush2.msra.mxu0 0.0
    %658 = vmatprep.subr.mxu0 0.0
    %659 = vmatpush2.msra.mxu0 0.0
    %660 = vmatprep.subr.mxu0 0.0
    %661 = vmatpush2.msra.mxu0 0.0
    %662 = vmatprep.subr.mxu0 0.0
    %663 = vmatpush2.msra.mxu0 0.0
    %664 = vmatprep.subr.mxu0 0.0
    %665 = vmatpush2.msra.mxu0 0.0
    %666 = vmatprep.subr.mxu0 0.0
    %667 = vmatpush2.msra.mxu0 0.0
    %668 = vmatprep.subr.mxu0 0.0
    %669 = vmatpush2.msra.mxu0 0.0
    %670 = vmatprep.subr.mxu0 0.0
    %671 = vmatpush2.msra.mxu0 0.0
    %672 = vmatprep.subr.mxu0 0.0
    %673 = vmatpush2.msra.mxu0 0.0
    %674 = vmatprep.subr.mxu0 0.0
    %675 = vmatpush2.msra.mxu0 0.0
    %676 = vmatprep.mubr.f32.mxu0 0.0
    %677 = vmatmul.mubr.f32.gmra.mxu0 %v610
    %v678 = vpop.f32.mrf.mxu0
    %v679 = vadd.f32 0.0, %v678
    %v680 = vpop.f32.mrf.mxu0
    %681 = vdwg.mxu0
    %683 = vrot.lane.b32.xlu0 %v606, 32
    %v684 = vpop.permute.xlu0 %683
    %687 = vrot.lane.b32.xlu0 %v679, 64
    %v688 = vpop.permute.xlu0 %687
    %v690 = vsel %vm345, %v56, %v684
    %v691 = vsel %vm69, %v690, %v688
    %s692 = scalar_lea.vmem %s9, 96
    %v693 = vld [vmem:[%s692] sm:$0xff]
    %v694 = vld [vmem:[%s692 + $0x8] sm:$0xff]
    %v695 = vld [vmem:[%s692 + $0x10] sm:$0xff]
    %v696 = vld [vmem:[%s692 + $0x18] sm:$0xff]
    %v697 = vld [vmem:[%s692 + $0x20] sm:$0xff]
    %v698 = vld [vmem:[%s692 + $0x28] sm:$0xff]
    %v699 = vld [vmem:[%s692 + $0x30] sm:$0xff]
    %v700 = vld [vmem:[%s692 + $0x38] sm:$0xff]
    %v701 = vld [vmem:[%s692 + $0x40] sm:$0xff]
    %v702 = vld [vmem:[%s692 + $0x48] sm:$0xff]
    %v703 = vld [vmem:[%s692 + $0x50] sm:$0xff]
    %v704 = vld [vmem:[%s692 + $0x58] sm:$0xff]
    %s705 = scalar_lea.vmem %s10, 1
    %v706 = vld [vmem:[%s705] sm:$0x1]
    %v708 = vlaneseq
    %v709 = vshrl.u32 %v708, 7
    %v710 = vsub.s32 0, %v709
    %v711 = vrot.slane %v706, %v710
    %v714 = vsel %vm377, %v691, 0
    %716 = vmatprep.subr.mxu0 0.0
    %717 = vmatpush1.msra.mxu0 0.0
    %718 = vmatprep.subr.mxu0 0.0
    %719 = vmatpush1.msra.mxu0 0.0
    %720 = vmatprep.subr.mxu0 0.0
    %721 = vmatpush1.msra.mxu0 0.0
    %722 = vmatprep.subr.mxu0 0.0
    %723 = vmatpush1.msra.mxu0 0.0
    %724 = vmatprep.subr.mxu0 0.0
    %725 = vmatpush1.msra.mxu0 %v704
    %726 = vmatprep.subr.mxu0 0.0
    %727 = vmatpush1.msra.mxu0 %v703
    %728 = vmatprep.subr.mxu0 0.0
    %729 = vmatpush1.msra.mxu0 %v702
    %730 = vmatprep.subr.mxu0 0.0
    %731 = vmatpush1.msra.mxu0 %v701
    %732 = vmatprep.subr.mxu0 0.0
    %733 = vmatpush1.msra.mxu0 %v700
    %734 = vmatprep.subr.mxu0 0.0
    %735 = vmatpush1.msra.mxu0 %v699
    %736 = vmatprep.subr.mxu0 0.0
    %737 = vmatpush1.msra.mxu0 %v698
    %738 = vmatprep.subr.mxu0 0.0
    %739 = vmatpush1.msra.mxu0 %v697
    %740 = vmatprep.subr.mxu0 0.0
    %741 = vmatpush1.msra.mxu0 %v696
    %742 = vmatprep.subr.mxu0 0.0
    %743 = vmatpush1.msra.mxu0 %v695
    %744 = vmatprep.subr.mxu0 0.0
    %745 = vmatpush1.msra.mxu0 %v694
    %746 = vmatprep.subr.mxu0 0.0
    %747 = vmatpush1.msra.mxu0 %v693
    %748 = vmatprep.subr.mxu0 0.0
    %749 = vmatpush2.msra.mxu0 0.0
    %750 = vmatprep.subr.mxu0 0.0
    %751 = vmatpush2.msra.mxu0 0.0
    %752 = vmatprep.subr.mxu0 0.0
    %753 = vmatpush2.msra.mxu0 0.0
    %754 = vmatprep.subr.mxu0 0.0
    %755 = vmatpush2.msra.mxu0 0.0
    %756 = vmatprep.subr.mxu0 0.0
    %757 = vmatpush2.msra.mxu0 0.0
    %758 = vmatprep.subr.mxu0 0.0
    %759 = vmatpush2.msra.mxu0 0.0
    %760 = vmatprep.subr.mxu0 0.0
    %761 = vmatpush2.msra.mxu0 0.0
    %762 = vmatprep.subr.mxu0 0.0
    %763 = vmatpush2.msra.mxu0 0.0
    %764 = vmatprep.subr.mxu0 0.0
    %765 = vmatpush2.msra.mxu0 0.0
    %766 = vmatprep.subr.mxu0 0.0
    %767 = vmatpush2.msra.mxu0 0.0
    %768 = vmatprep.subr.mxu0 0.0
    %769 = vmatpush2.msra.mxu0 0.0
    %770 = vmatprep.subr.mxu0 0.0
    %771 = vmatpush2.msra.mxu0 0.0
    %772 = vmatprep.subr.mxu0 0.0
    %773 = vmatpush2.msra.mxu0 0.0
    %774 = vmatprep.subr.mxu0 0.0
    %775 = vmatpush2.msra.mxu0 0.0
    %776 = vmatprep.subr.mxu0 0.0
    %777 = vmatpush2.msra.mxu0 0.0
    %778 = vmatprep.subr.mxu0 0.0
    %779 = vmatpush2.msra.mxu0 0.0
    %780 = vmatprep.mubr.f32.mxu0 0.0
    %781 = vmatmul.mubr.f32.gmra.mxu0 %v714
    %v782 = vpop.f32.mrf.mxu0
    %v783 = vadd.f32 %v711, %v782
    %v784 = vpop.f32.mrf.mxu0
    %785 = vdwg.mxu0
    %v786 = vmax.f32 %v783, 0.0
    %788 = vrot.lane.b32.xlu0 %v786, 96
    %v789 = vpop.permute.xlu0 %788
    %v791 = vadd.f32 %v786, %v789
    %v792 = vmul.f32 %v791, 0.5
    %v793 = vld [vmem:[%s7] sm:$0xff]
    %v794 = vld [vmem:[%s7 + $0x8] sm:$0xff]
    %v795 = vld [vmem:[%s7 + $0x10] sm:$0xff]
    %v796 = vld [vmem:[%s7 + $0x18] sm:$0xff]
    %v797 = vld [vmem:[%s7 + $0x20] sm:$0xff]
    %v798 = vld [vmem:[%s7 + $0x28] sm:$0xff]
    %v799 = vld [vmem:[%s7 + $0x30] sm:$0xff]
    %v800 = vld [vmem:[%s7 + $0x38] sm:$0xff]
    %v801 = vld [vmem:[%s8] sm:$0xff]
    %v802 = vld [vmem:[%s8 + $0x8] sm:$0xff]
    %v803 = vld [vmem:[%s8 + $0x10] sm:$0xff]
    %v804 = vld [vmem:[%s8 + $0x18] sm:$0xff]
    %v805 = vld [vmem:[%s8 + $0x20] sm:$0xff]
    %v806 = vld [vmem:[%s8 + $0x28] sm:$0xff]
    %v807 = vld [vmem:[%s8 + $0x30] sm:$0xff]
    %v808 = vld [vmem:[%s8 + $0x38] sm:$0xff]
    %v810 = vsel %vm535, %v793, 0
    %v813 = vsel %vm535, %v794, 0
    %v816 = vsel %vm535, %v795, 0
    %v819 = vsel %vm535, %v796, 0
    %v822 = vsel %vm535, %v797, 0
    %v825 = vsel %vm535, %v798, 0
    %v828 = vsel %vm535, %v799, 0
    %v831 = vsel %vm535, %v800, 0
    %833 = vmatprep.subr.mxu0 0.0
    %834 = vmatpush1.msra.mxu0 0.0
    %835 = vmatprep.subr.mxu0 0.0
    %836 = vmatpush1.msra.mxu0 0.0
    %837 = vmatprep.subr.mxu0 0.0
    %838 = vmatpush1.msra.mxu0 0.0
    %839 = vmatprep.subr.mxu0 0.0
    %840 = vmatpush1.msra.mxu0 0.0
    %841 = vmatprep.subr.mxu0 0.0
    %842 = vmatpush1.msra.mxu0 0.0
    %843 = vmatprep.subr.mxu0 0.0
    %844 = vmatpush1.msra.mxu0 0.0
    %845 = vmatprep.subr.mxu0 0.0
    %846 = vmatpush1.msra.mxu0 0.0
    %847 = vmatprep.subr.mxu0 0.0
    %848 = vmatpush1.msra.mxu0 0.0
    %849 = vmatprep.subr.mxu0 0.0
    %850 = vmatpush1.msra.mxu0 0.0
    %851 = vmatprep.subr.mxu0 0.0
    %852 = vmatpush1.msra.mxu0 0.0
    %853 = vmatprep.subr.mxu0 0.0
    %854 = vmatpush1.msra.mxu0 %v532
    %855 = vmatprep.subr.mxu0 0.0
    %856 = vmatpush1.msra.mxu0 %v531
    %857 = vmatprep.subr.mxu0 0.0
    %858 = vmatpush1.msra.mxu0 %v530
    %859 = vmatprep.subr.mxu0 0.0
    %860 = vmatpush1.msra.mxu0 %v529
    %861 = vmatprep.subr.mxu0 0.0
    %862 = vmatpush1.msra.mxu0 %v528
    %863 = vmatprep.subr.mxu0 0.0
    %864 = vmatpush1.msra.mxu0 %v527
    %865 = vmatprep.subr.mxu0 0.0
    %866 = vmatpush2.msra.mxu0 0.0
    %867 = vmatprep.subr.mxu0 0.0
    %868 = vmatpush2.msra.mxu0 0.0
    %869 = vmatprep.subr.mxu0 0.0
    %870 = vmatpush2.msra.mxu0 0.0
    %871 = vmatprep.subr.mxu0 0.0
    %872 = vmatpush2.msra.mxu0 0.0
    %873 = vmatprep.subr.mxu0 0.0
    %874 = vmatpush2.msra.mxu0 0.0
    %875 = vmatprep.subr.mxu0 0.0
    %876 = vmatpush2.msra.mxu0 0.0
    %877 = vmatprep.subr.mxu0 0.0
    %878 = vmatpush2.msra.mxu0 0.0
    %879 = vmatprep.subr.mxu0 0.0
    %880 = vmatpush2.msra.mxu0 0.0
    %881 = vmatprep.subr.mxu0 0.0
    %882 = vmatpush2.msra.mxu0 0.0
    %883 = vmatprep.subr.mxu0 0.0
    %884 = vmatpush2.msra.mxu0 0.0
    %885 = vmatprep.subr.mxu0 0.0
    %886 = vmatpush2.msra.mxu0 0.0
    %887 = vmatprep.subr.mxu0 0.0
    %888 = vmatpush2.msra.mxu0 0.0
    %889 = vmatprep.subr.mxu0 0.0
    %890 = vmatpush2.msra.mxu0 0.0
    %891 = vmatprep.subr.mxu0 0.0
    %892 = vmatpush2.msra.mxu0 0.0
    %893 = vmatprep.subr.mxu0 0.0
    %894 = vmatpush2.msra.mxu0 0.0
    %895 = vmatprep.subr.mxu0 0.0
    %896 = vmatpush2.msra.mxu0 0.0
    %897 = vmatprep.mubr.f32.mxu0 0.0
    %898 = vmatmul.mubr.f32.gmra.mxu0 %v810
    %v899 = vpop.f32.mrf.mxu0
    %v900 = vadd.f32 0.0, %v899
    %v901 = vpop.f32.mrf.mxu0
    %902 = vmatprep.mubr.f32.mxu0 0.0
    %903 = vmatmul.mubr.f32.gmra.mxu0 %v813
    %v904 = vpop.f32.mrf.mxu0
    %v905 = vadd.f32 0.0, %v904
    %v906 = vpop.f32.mrf.mxu0
    %907 = vmatprep.mubr.f32.mxu0 0.0
    %908 = vmatmul.mubr.f32.gmra.mxu0 %v816
    %v909 = vpop.f32.mrf.mxu0
    %v910 = vadd.f32 0.0, %v909
    %v911 = vpop.f32.mrf.mxu0
    %912 = vmatprep.mubr.f32.mxu0 0.0
    %913 = vmatmul.mubr.f32.gmra.mxu0 %v819
    %v914 = vpop.f32.mrf.mxu0
    %v915 = vadd.f32 0.0, %v914
    %v916 = vpop.f32.mrf.mxu0
    %917 = vmatprep.mubr.f32.mxu0 0.0
    %918 = vmatmul.mubr.f32.gmra.mxu0 %v822
    %v919 = vpop.f32.mrf.mxu0
    %v920 = vadd.f32 0.0, %v919
    %v921 = vpop.f32.mrf.mxu0
    %922 = vmatprep.mubr.f32.mxu0 0.0
    %923 = vmatmul.mubr.f32.gmra.mxu0 %v825
    %v924 = vpop.f32.mrf.mxu0
    %v925 = vadd.f32 0.0, %v924
    %v926 = vpop.f32.mrf.mxu0
    %927 = vmatprep.mubr.f32.mxu0 0.0
    %928 = vmatmul.mubr.f32.gmra.mxu0 %v828
    %v929 = vpop.f32.mrf.mxu0
    %v930 = vadd.f32 0.0, %v929
    %v931 = vpop.f32.mrf.mxu0
    %932 = vmatprep.mubr.f32.mxu0 0.0
    %933 = vmatmul.mubr.f32.gmra.mxu0 %v831
    %v934 = vpop.f32.mrf.mxu0
    %v935 = vadd.f32 0.0, %v934
    %v936 = vpop.f32.mrf.mxu0
    %937 = vdwg.mxu0
    %v939 = vsel %vm183, %v801, 0
    %v942 = vsel %vm183, %v802, 0
    %v945 = vsel %vm183, %v803, 0
    %v948 = vsel %vm183, %v804, 0
    %v951 = vsel %vm183, %v805, 0
    %v954 = vsel %vm183, %v806, 0
    %v957 = vsel %vm183, %v807, 0
    %v960 = vsel %vm183, %v808, 0
    %962 = vmatprep.subr.mxu0 0.0
    %963 = vmatpush1.msra.mxu0 0.0
    %964 = vmatprep.subr.mxu0 0.0
    %965 = vmatpush1.msra.mxu0 0.0
    %966 = vmatprep.subr.mxu0 0.0
    %967 = vmatpush1.msra.mxu0 0.0
    %968 = vmatprep.subr.mxu0 0.0
    %969 = vmatpush1.msra.mxu0 0.0
    %970 = vmatprep.subr.mxu0 0.0
    %971 = vmatpush1.msra.mxu0 0.0
    %972 = vmatprep.subr.mxu0 0.0
    %973 = vmatpush1.msra.mxu0 0.0
    %974 = vmatprep.subr.mxu0 0.0
    %975 = vmatpush1.msra.mxu0 0.0
    %976 = vmatprep.subr.mxu0 0.0
    %977 = vmatpush1.msra.mxu0 0.0
    %978 = vmatprep.subr.mxu0 0.0
    %979 = vmatpush1.msra.mxu0 0.0
    %980 = vmatprep.subr.mxu0 0.0
    %981 = vmatpush1.msra.mxu0 0.0
    %982 = vmatprep.subr.mxu0 0.0
    %983 = vmatpush1.msra.mxu0 0.0
    %984 = vmatprep.subr.mxu0 0.0
    %985 = vmatpush1.msra.mxu0 0.0
    %986 = vmatprep.subr.mxu0 0.0
    %987 = vmatpush1.msra.mxu0 0.0
    %988 = vmatprep.subr.mxu0 0.0
    %989 = vmatpush1.msra.mxu0 0.0
    %990 = vmatprep.subr.mxu0 0.0
    %991 = vmatpush1.msra.mxu0 0.0
    %992 = vmatprep.subr.mxu0 0.0
    %993 = vmatpush1.msra.mxu0 %v792
    %994 = vmatprep.subr.mxu0 0.0
    %995 = vmatpush2.msra.mxu0 0.0
    %996 = vmatprep.subr.mxu0 0.0
    %997 = vmatpush2.msra.mxu0 0.0
    %998 = vmatprep.subr.mxu0 0.0
    %999 = vmatpush2.msra.mxu0 0.0
    %1000 = vmatprep.subr.mxu0 0.0
    %1001 = vmatpush2.msra.mxu0 0.0
    %1002 = vmatprep.subr.mxu0 0.0
    %1003 = vmatpush2.msra.mxu0 0.0
    %1004 = vmatprep.subr.mxu0 0.0
    %1005 = vmatpush2.msra.mxu0 0.0
    %1006 = vmatprep.subr.mxu0 0.0
    %1007 = vmatpush2.msra.mxu0 0.0
    %1008 = vmatprep.subr.mxu0 0.0
    %1009 = vmatpush2.msra.mxu0 0.0
    %1010 = vmatprep.subr.mxu0 0.0
    %1011 = vmatpush2.msra.mxu0 0.0
    %1012 = vmatprep.subr.mxu0 0.0
    %1013 = vmatpush2.msra.mxu0 0.0
    %1014 = vmatprep.subr.mxu0 0.0
    %1015 = vmatpush2.msra.mxu0 0.0
    %1016 = vmatprep.subr.mxu0 0.0
    %1017 = vmatpush2.msra.mxu0 0.0
    %1018 = vmatprep.subr.mxu0 0.0
    %1019 = vmatpush2.msra.mxu0 0.0
    %1020 = vmatprep.subr.mxu0 0.0
    %1021 = vmatpush2.msra.mxu0 0.0
    %1022 = vmatprep.subr.mxu0 0.0
    %1023 = vmatpush2.msra.mxu0 0.0
    %1024 = vmatprep.subr.mxu0 0.0
    %1025 = vmatpush2.msra.mxu0 0.0
    %1026 = vmatprep.mubr.f32.mxu0 0.0
    %1027 = vmatmul.mubr.f32.gmra.mxu0 %v939
    %v1028 = vpop.f32.mrf.mxu0
    %v1029 = vadd.f32 0.0, %v1028
    %v1030 = vpop.f32.mrf.mxu0
    %1031 = vmatprep.mubr.f32.mxu0 0.0
    %1032 = vmatmul.mubr.f32.gmra.mxu0 %v942
    %v1033 = vpop.f32.mrf.mxu0
    %v1034 = vadd.f32 0.0, %v1033
    %v1035 = vpop.f32.mrf.mxu0
    %1036 = vmatprep.mubr.f32.mxu0 0.0
    %1037 = vmatmul.mubr.f32.gmra.mxu0 %v945
    %v1038 = vpop.f32.mrf.mxu0
    %v1039 = vadd.f32 0.0, %v1038
    %v1040 = vpop.f32.mrf.mxu0
    %1041 = vmatprep.mubr.f32.mxu0 0.0
    %1042 = vmatmul.mubr.f32.gmra.mxu0 %v948
    %v1043 = vpop.f32.mrf.mxu0
    %v1044 = vadd.f32 0.0, %v1043
    %v1045 = vpop.f32.mrf.mxu0
    %1046 = vmatprep.mubr.f32.mxu0 0.0
    %1047 = vmatmul.mubr.f32.gmra.mxu0 %v951
    %v1048 = vpop.f32.mrf.mxu0
    %v1049 = vadd.f32 0.0, %v1048
    %v1050 = vpop.f32.mrf.mxu0
    %1051 = vmatprep.mubr.f32.mxu0 0.0
    %1052 = vmatmul.mubr.f32.gmra.mxu0 %v954
    %v1053 = vpop.f32.mrf.mxu0
    %v1054 = vadd.f32 0.0, %v1053
    %v1055 = vpop.f32.mrf.mxu0
    %1056 = vmatprep.mubr.f32.mxu0 0.0
    %1057 = vmatmul.mubr.f32.gmra.mxu0 %v957
    %v1058 = vpop.f32.mrf.mxu0
    %v1059 = vadd.f32 0.0, %v1058
    %v1060 = vpop.f32.mrf.mxu0
    %1061 = vmatprep.mubr.f32.mxu0 0.0
    %1062 = vmatmul.mubr.f32.gmra.mxu0 %v960
    %v1063 = vpop.f32.mrf.mxu0
    %v1064 = vadd.f32 0.0, %v1063
    %v1065 = vpop.f32.mrf.mxu0
    %1066 = vdwg.mxu0
    %1075 = vrot.lane.b32.xlu0 %v900, 32
    %v1076 = vpop.permute.xlu0 %1075
    %1077 = vrot.lane.b32.xlu0 %v905, 32
    %v1078 = vpop.permute.xlu0 %1077
    %1079 = vrot.lane.b32.xlu0 %v910, 32
    %v1080 = vpop.permute.xlu0 %1079
    %1081 = vrot.lane.b32.xlu0 %v915, 32
    %v1082 = vpop.permute.xlu0 %1081
    %1083 = vrot.lane.b32.xlu0 %v920, 32
    %v1084 = vpop.permute.xlu0 %1083
    %1085 = vrot.lane.b32.xlu0 %v925, 32
    %v1086 = vpop.permute.xlu0 %1085
    %1087 = vrot.lane.b32.xlu0 %v930, 32
    %v1088 = vpop.permute.xlu0 %1087
    %1089 = vrot.lane.b32.xlu0 %v935, 32
    %v1090 = vpop.permute.xlu0 %1089
    %1107 = vrot.lane.b32.xlu0 %v1029, 64
    %v1108 = vpop.permute.xlu0 %1107
    %1109 = vrot.lane.b32.xlu0 %v1034, 64
    %v1110 = vpop.permute.xlu0 %1109
    %1111 = vrot.lane.b32.xlu0 %v1039, 64
    %v1112 = vpop.permute.xlu0 %1111
    %1113 = vrot.lane.b32.xlu0 %v1044, 64
    %v1114 = vpop.permute.xlu0 %1113
    %1115 = vrot.lane.b32.xlu0 %v1049, 64
    %v1116 = vpop.permute.xlu0 %1115
    %1117 = vrot.lane.b32.xlu0 %v1054, 64
    %v1118 = vpop.permute.xlu0 %1117
    %1119 = vrot.lane.b32.xlu0 %v1059, 64
    %v1120 = vpop.permute.xlu0 %1119
    %1121 = vrot.lane.b32.xlu0 %v1064, 64
    %v1122 = vpop.permute.xlu0 %1121
    %v1131 = vsel %vm345, %v42, %v1076
    %v1132 = vsel %vm345, %v43, %v1078
    %v1133 = vsel %vm345, %v44, %v1080
    %v1134 = vsel %vm345, %v45, %v1082
    %v1135 = vsel %vm345, %v46, %v1084
    %v1136 = vsel %vm345, %v47, %v1086
    %v1137 = vsel %vm345, %v48, %v1088
    %v1138 = vsel %vm345, %v49, %v1090
    %v1139 = vsel %vm69, %v1131, %v1108
    %v1140 = vsel %vm69, %v1132, %v1110
    %v1141 = vsel %vm69, %v1133, %v1112
    %v1142 = vsel %vm69, %v1134, %v1114
    %v1143 = vsel %vm69, %v1135, %v1116
    %v1144 = vsel %vm69, %v1136, %v1118
    %v1145 = vsel %vm69, %v1137, %v1120
    %v1146 = vsel %vm69, %v1138, %v1122
    %s1147 = scalar_lea.vmem %s9, 192
    %v1148 = vld [vmem:[%s1147] sm:$0xff]
    %v1149 = vld [vmem:[%s1147 + $0x8] sm:$0xff]
    %v1150 = vld [vmem:[%s1147 + $0x10] sm:$0xff]
    %v1151 = vld [vmem:[%s1147 + $0x18] sm:$0xff]
    %v1152 = vld [vmem:[%s1147 + $0x20] sm:$0xff]
    %v1153 = vld [vmem:[%s1147 + $0x28] sm:$0xff]
    %v1154 = vld [vmem:[%s1147 + $0x30] sm:$0xff]
    %v1155 = vld [vmem:[%s1147 + $0x38] sm:$0xff]
    %v1156 = vld [vmem:[%s1147 + $0x40] sm:$0xff]
    %v1157 = vld [vmem:[%s1147 + $0x48] sm:$0xff]
    %v1158 = vld [vmem:[%s1147 + $0x50] sm:$0xff]
    %v1159 = vld [vmem:[%s1147 + $0x58] sm:$0xff]
    %s1160 = scalar_lea.vmem %s10, 2
    %v1161 = vld [vmem:[%s1160] sm:$0x1]
    %v1163 = vlaneseq
    %v1164 = vshrl.u32 %v1163, 7
    %v1165 = vsub.s32 0, %v1164
    %v1166 = vrot.slane %v1161, %v1165
    %v1169 = vsel %vm377, %v1139, 0
    %v1172 = vsel %vm377, %v1140, 0
    %v1175 = vsel %vm377, %v1141, 0
    %v1178 = vsel %vm377, %v1142, 0
    %v1181 = vsel %vm377, %v1143, 0
    %v1184 = vsel %vm377, %v1144, 0
    %v1187 = vsel %vm377, %v1145, 0
    %v1190 = vsel %vm377, %v1146, 0
    %1192 = vmatprep.subr.mxu0 0.0
    %1193 = vmatpush1.msra.mxu0 0.0
    %1194 = vmatprep.subr.mxu0 0.0
    %1195 = vmatpush1.msra.mxu0 0.0
    %1196 = vmatprep.subr.mxu0 0.0
    %1197 = vmatpush1.msra.mxu0 0.0
    %1198 = vmatprep.subr.mxu0 0.0
    %1199 = vmatpush1.msra.mxu0 0.0
    %1200 = vmatprep.subr.mxu0 0.0
    %1201 = vmatpush1.msra.mxu0 %v1159
    %1202 = vmatprep.subr.mxu0 0.0
    %1203 = vmatpush1.msra.mxu0 %v1158
    %1204 = vmatprep.subr.mxu0 0.0
    %1205 = vmatpush1.msra.mxu0 %v1157
    %1206 = vmatprep.subr.mxu0 0.0
    %1207 = vmatpush1.msra.mxu0 %v1156
    %1208 = vmatprep.subr.mxu0 0.0
    %1209 = vmatpush1.msra.mxu0 %v1155
    %1210 = vmatprep.subr.mxu0 0.0
    %1211 = vmatpush1.msra.mxu0 %v1154
    %1212 = vmatprep.subr.mxu0 0.0
    %1213 = vmatpush1.msra.mxu0 %v1153
    %1214 = vmatprep.subr.mxu0 0.0
    %1215 = vmatpush1.msra.mxu0 %v1152
    %1216 = vmatprep.subr.mxu0 0.0
    %1217 = vmatpush1.msra.mxu0 %v1151
    %1218 = vmatprep.subr.mxu0 0.0
    %1219 = vmatpush1.msra.mxu0 %v1150
    %1220 = vmatprep.subr.mxu0 0.0
    %1221 = vmatpush1.msra.mxu0 %v1149
    %1222 = vmatprep.subr.mxu0 0.0
    %1223 = vmatpush1.msra.mxu0 %v1148
    %1224 = vmatprep.subr.mxu0 0.0
    %1225 = vmatpush2.msra.mxu0 0.0
    %1226 = vmatprep.subr.mxu0 0.0
    %1227 = vmatpush2.msra.mxu0 0.0
    %1228 = vmatprep.subr.mxu0 0.0
    %1229 = vmatpush2.msra.mxu0 0.0
    %1230 = vmatprep.subr.mxu0 0.0
    %1231 = vmatpush2.msra.mxu0 0.0
    %1232 = vmatprep.subr.mxu0 0.0
    %1233 = vmatpush2.msra.mxu0 0.0
    %1234 = vmatprep.subr.mxu0 0.0
    %1235 = vmatpush2.msra.mxu0 0.0
    %1236 = vmatprep.subr.mxu0 0.0
    %1237 = vmatpush2.msra.mxu0 0.0
    %1238 = vmatprep.subr.mxu0 0.0
    %1239 = vmatpush2.msra.mxu0 0.0
    %1240 = vmatprep.subr.mxu0 0.0
    %1241 = vmatpush2.msra.mxu0 0.0
    %1242 = vmatprep.subr.mxu0 0.0
    %1243 = vmatpush2.msra.mxu0 0.0
    %1244 = vmatprep.subr.mxu0 0.0
    %1245 = vmatpush2.msra.mxu0 0.0
    %1246 = vmatprep.subr.mxu0 0.0
    %1247 = vmatpush2.msra.mxu0 0.0
    %1248 = vmatprep.subr.mxu0 0.0
    %1249 = vmatpush2.msra.mxu0 0.0
    %1250 = vmatprep.subr.mxu0 0.0
    %1251 = vmatpush2.msra.mxu0 0.0
    %1252 = vmatprep.subr.mxu0 0.0
    %1253 = vmatpush2.msra.mxu0 0.0
    %1254 = vmatprep.subr.mxu0 0.0
    %1255 = vmatpush2.msra.mxu0 0.0
    %1256 = vmatprep.mubr.f32.mxu0 0.0
    %1257 = vmatmul.mubr.f32.gmra.mxu0 %v1169
    %v1258 = vpop.f32.mrf.mxu0
    %v1259 = vadd.f32 %v1166, %v1258
    %v1260 = vpop.f32.mrf.mxu0
    %1261 = vmatprep.mubr.f32.mxu0 0.0
    %1262 = vmatmul.mubr.f32.gmra.mxu0 %v1172
    %v1263 = vpop.f32.mrf.mxu0
    %v1264 = vadd.f32 %v1166, %v1263
    %v1265 = vpop.f32.mrf.mxu0
    %1266 = vmatprep.mubr.f32.mxu0 0.0
    %1267 = vmatmul.mubr.f32.gmra.mxu0 %v1175
    %v1268 = vpop.f32.mrf.mxu0
    %v1269 = vadd.f32 %v1166, %v1268
    %v1270 = vpop.f32.mrf.mxu0
    %1271 = vmatprep.mubr.f32.mxu0 0.0
    %1272 = vmatmul.mubr.f32.gmra.mxu0 %v1178
    %v1273 = vpop.f32.mrf.mxu0
    %v1274 = vadd.f32 %v1166, %v1273
    %v1275 = vpop.f32.mrf.mxu0
    %1276 = vmatprep.mubr.f32.mxu0 0.0
    %1277 = vmatmul.mubr.f32.gmra.mxu0 %v1181
    %v1278 = vpop.f32.mrf.mxu0
    %v1279 = vadd.f32 %v1166, %v1278
    %v1280 = vpop.f32.mrf.mxu0
    %1281 = vmatprep.mubr.f32.mxu0 0.0
    %1282 = vmatmul.mubr.f32.gmra.mxu0 %v1184
    %v1283 = vpop.f32.mrf.mxu0
    %v1284 = vadd.f32 %v1166, %v1283
    %v1285 = vpop.f32.mrf.mxu0
    %1286 = vmatprep.mubr.f32.mxu0 0.0
    %1287 = vmatmul.mubr.f32.gmra.mxu0 %v1187
    %v1288 = vpop.f32.mrf.mxu0
    %v1289 = vadd.f32 %v1166, %v1288
    %v1290 = vpop.f32.mrf.mxu0
    %1291 = vmatprep.mubr.f32.mxu0 0.0
    %1292 = vmatmul.mubr.f32.gmra.mxu0 %v1190
    %v1293 = vpop.f32.mrf.mxu0
    %v1294 = vadd.f32 %v1166, %v1293
    %v1295 = vpop.f32.mrf.mxu0
    %1296 = vdwg.mxu0
    %v1297 = vmax.f32 %v1259, 0.0
    %v1298 = vmax.f32 %v1264, 0.0
    %v1299 = vmax.f32 %v1269, 0.0
    %v1300 = vmax.f32 %v1274, 0.0
    %v1301 = vmax.f32 %v1279, 0.0
    %v1302 = vmax.f32 %v1284, 0.0
    %v1303 = vmax.f32 %v1289, 0.0
    %v1304 = vmax.f32 %v1294, 0.0
    %1313 = vrot.lane.b32.xlu0 %v1297, 96
    %v1314 = vpop.permute.xlu0 %1313
    %1315 = vrot.lane.b32.xlu0 %v1298, 96
    %v1316 = vpop.permute.xlu0 %1315
    %1317 = vrot.lane.b32.xlu0 %v1299, 96
    %v1318 = vpop.permute.xlu0 %1317
    %1319 = vrot.lane.b32.xlu0 %v1300, 96
    %v1320 = vpop.permute.xlu0 %1319
    %1321 = vrot.lane.b32.xlu0 %v1301, 96
    %v1322 = vpop.permute.xlu0 %1321
    %1323 = vrot.lane.b32.xlu0 %v1302, 96
    %v1324 = vpop.permute.xlu0 %1323
    %1325 = vrot.lane.b32.xlu0 %v1303, 96
    %v1326 = vpop.permute.xlu0 %1325
    %1327 = vrot.lane.b32.xlu0 %v1304, 96
    %v1328 = vpop.permute.xlu0 %1327
    %v1337 = vadd.f32 %v1297, %v1314
    %v1338 = vadd.f32 %v1298, %v1316
    %v1339 = vadd.f32 %v1299, %v1318
    %v1340 = vadd.f32 %v1300, %v1320
    %v1341 = vadd.f32 %v1301, %v1322
    %v1342 = vadd.f32 %v1302, %v1324
    %v1343 = vadd.f32 %v1303, %v1326
    %v1344 = vadd.f32 %v1304, %v1328
    %v1345 = vmul.f32 %v1337, 0.5
    %v1346 = vmul.f32 %v1338, 0.5
    %v1347 = vmul.f32 %v1339, 0.5
    %v1348 = vmul.f32 %v1340, 0.5
    %v1349 = vmul.f32 %v1341, 0.5
    %v1350 = vmul.f32 %v1342, 0.5
    %v1351 = vmul.f32 %v1343, 0.5
    %v1352 = vmul.f32 %v1344, 0.5
    %1353 = vst.msk [vmem:[%s11] sm:$0xff] %vm345, %v527
    %1354 = vst.msk [vmem:[%s11 + $0x8] sm:$0xff] %vm345, %v528
    %1355 = vst.msk [vmem:[%s11 + $0x10] sm:$0xff] %vm345, %v529
    %1356 = vst.msk [vmem:[%s11 + $0x18] sm:$0xff] %vm345, %v530
    %1357 = vst.msk [vmem:[%s11 + $0x20] sm:$0xff] %vm345, %v531
    %1358 = vst.msk [vmem:[%s11 + $0x28] sm:$0xff] %vm345, %v532
    %1359 = vst.msk [vmem:[#allocation2] sm:$0xff] %vm345, %v792
    %1360 = vst.msk [vmem:[%s13] sm:$0xff] %vm345, %v1345
    %1361 = vst.msk [vmem:[%s13 + $0x8] sm:$0xff] %vm345, %v1346
    %1362 = vst.msk [vmem:[%s13 + $0x10] sm:$0xff] %vm345, %v1347
    %1363 = vst.msk [vmem:[%s13 + $0x18] sm:$0xff] %vm345, %v1348
    %1364 = vst.msk [vmem:[%s13 + $0x20] sm:$0xff] %vm345, %v1349
    %1365 = vst.msk [vmem:[%s13 + $0x28] sm:$0xff] %vm345, %v1350
    %1366 = vst.msk [vmem:[%s13 + $0x30] sm:$0xff] %vm345, %v1351
    %1367 = vst.msk [vmem:[%s13 + $0x38] sm:$0xff] %vm345, %v1352
    // Predicated region
    $region46: #{_tripartite_forward.1} parent=1 // pred_check
      _
    $region47: #{_tripartite_forward.1} parent=1 // pred_check_branch
      %1369 = sbr.rel (0) target = $region49
    $region48: #{_tripartite_forward.1} parent=1 // pred_region
      _
    $region49: #{_tripartite_forward.1} parent=1 // pred_fallthru
      _
    // Predicated region
    $region50: #{_tripartite_forward.1} parent=1 // pred_check
      _
    $region51: #{_tripartite_forward.1} parent=1 // pred_check_branch
      %1371 = sbr.rel (0) target = $region53
    $region52: #{_tripartite_forward.1} parent=1 // pred_region
      %s1373 = ssub.s32 128, 128
      %1374 = vsyncadd [#allocation3], %s1373
      %s1376 = sshll.u32 [#allocation2], 4
      %s1377 = int_to_ptr.vmem [resolvable:$true] %s1376
      %1379 = dma.vmem_to_hbm [thread:$0]  %s1377, 128, %s12, [#allocation3]
    $region53: #{_tripartite_forward.1} parent=1 // pred_fallthru
      _
    // Predicated region
    $region54: #{_tripartite_forward.1} parent=1 // pred_check
      _
    $region55: #{_tripartite_forward.1} parent=1 // pred_check_branch
      %1381 = sbr.rel (0) target = $region57
    $region56: #{_tripartite_forward.1} parent=1 // pred_region
      _
    $region57: #{_tripartite_forward.1} parent=1 // pred_fallthru
      _
    // Predicated region
    $region58: #{_tripartite_forward.1} parent=1 // pred_check
      _
    $region59: #{_tripartite_forward.1} parent=1 // pred_check_branch
      %1383 = sbr.rel (0) target = $region61
    $region60: #{_tripartite_forward.1} parent=1 // pred_region
      _
    $region61: #{_tripartite_forward.1} parent=1 // pred_fallthru
      _
    // Predicated region
    $region62: #{_tripartite_forward.1} parent=1 // pred_check
      _
    $region63: #{_tripartite_forward.1} parent=1 // pred_check_branch
      %1385 = sbr.rel (0) target = $region65
    $region64: #{_tripartite_forward.1} parent=1 // pred_region
      %1386 = dma.done [#allocation3], 128
    $region65: #{_tripartite_forward.1} parent=1 // pred_fallthru
      _
    // Predicated region
    $region66: #{_tripartite_forward.1} parent=1 // pred_check
      _
    $region67: #{_tripartite_forward.1} parent=1 // pred_check_branch
      %1388 = sbr.rel (0) target = $region69
    $region68: #{_tripartite_forward.1} parent=1 // pred_region
      _
    $region69: #{_tripartite_forward.1} parent=1 // pred_fallthru
      _
    %1389 = vsyncpa [#allocation3], 1

</llo_original>
